<compile_context>
chip_gen: v5e
topology: v5e:2x2
jax: 0.10.0
libtpu: 0.0.40
codegen_flags: <defaults>
</compile_context>

<pallas_src>
import math

import jax
import jax.numpy as jnp
from jax.experimental import pallas as pl
from jax.experimental.pallas import tpu as pltpu

EPS = 1e-5                        # PyTorch LayerNorm default eps
VMEM_BUDGET = 20 * 1024 * 1024    # target live footprint per grid step (all gens)
VMEM_LIMIT = 48 * 1024 * 1024     # scoped VMEM cap for Mosaic (< v7x 64 MiB physical)


def _layernorm(x, gamma, beta):
    mu = jnp.mean(x, axis=-1, keepdims=True)
    var = jnp.mean((x - mu) ** 2, axis=-1, keepdims=True)
    return (x - mu) * jax.lax.rsqrt(var + EPS) * gamma + beta


def int_attention_kernel(x_ref, wpn_ref, w1t_ref, b1_ref, w2t_ref, vec_ref, o_ref):
    TG, N, D = x_ref.shape
    R = TG * N
    mm_dtype = w1t_ref.dtype                      # bf16 (default) or f32; host decides

    x = x_ref[...].astype(jnp.float32)            # (TG, N, D)
    x2d = x.reshape(R, D)                         # leading-dim merge: free

    # ---- PeriodNorm on the Q/K stream, folded into one (D, D) matmul --------
    # qk = x - moving_avg(x)  ==  x @ (I - M);  (I - M) precomputed on host.
    # Kept in f32: matrix entries are exact and this feeds the softmax.
    qk = jnp.dot(x2d, wpn_ref[...],
                 preferred_element_type=jnp.float32).reshape(TG, N, D)

    # ---- attention -----------------------------------------------------------
    # TODO(synk): the real `attention` submodule is constructor-injected in the
    # PyTorch module; a parameter-free scaled dot-product attention
    # softmax(qk qk^T / sqrt(D)) @ x is used as a deterministic stand-in.
    scale = 1.0 / math.sqrt(D)
    s = jnp.einsum('gnd,gmd->gnm', qk.astype(mm_dtype), qk.astype(mm_dtype),
                   preferred_element_type=jnp.float32) * scale
    s = s - jnp.max(s, axis=-1, keepdims=True)
    p = jnp.exp(s)
    p = p * pl.reciprocal(jnp.sum(p, axis=-1, keepdims=True), approx=True)
    attn = jnp.einsum('gnm,gmd->gnd', p.astype(mm_dtype), x.astype(mm_dtype),
                      preferred_element_type=jnp.float32)

    # LayerNorm / bias vectors, collapsed into one (8, D) operand on the host:
    # rows = [b2, g1, be1, g2, be2, 0, 0, 0]
    vecs = vec_ref[...].astype(jnp.float32)
    b2, g1, be1 = vecs[0:1], vecs[1:2], vecs[2:3]
    g2, be2 = vecs[3:4], vecs[4:5]

    # residual (dropout == identity in eval mode); flatten rows for FFN / LN
    x1 = (x + attn).reshape(R, D)

    # y = x = norm1(x)  -> the second residual uses the *normed* activations
    x2 = _layernorm(x1, g1, be1)

    # FFN with host-pre-transposed (and pre-cast) weights; f32 accumulation.
    h = jnp.maximum(
        jnp.dot(x2.astype(mm_dtype), w1t_ref[...],
                preferred_element_type=jnp.float32) + b1_ref[...], 0.0)
    y = jnp.dot(h.astype(mm_dtype), w2t_ref[...],
                preferred_element_type=jnp.float32) + b2

    out = _layernorm(x2 + y, g2, be2)
    o_ref[...] = out.reshape(TG, N, D).astype(o_ref.dtype)   # leading split: free


# ------------------------------ host-side helpers ---------------------------

def _period_norm_matrix(D, L):
    """(D, D) matrix W such that x @ W == PeriodNorm(x) along the last axis."""
    i = jnp.arange(D)[:, None]
    j = jnp.arange(D)[None, :]
    lo = jnp.maximum(j - (L - 1), 0)      # window for j >= L-1: [j-L+1, j]
    hi = jnp.maximum(j, L - 1)            # window for j <  L-1: [0, L-1] (replicate pad)
    m = ((i >= lo) & (i <= hi)).astype(jnp.float32) / float(L)
    return jnp.eye(D, dtype=jnp.float32) - m


def _round_up(v, m):
    return -(-v // m) * m


def _num_tensorcores():
    """Best-effort TensorCores-per-chip (2 on megacore parts, else 1)."""
    try:
        dev = jax.devices()[0]
    except Exception:
        return 1
    for attr in ("num_cores", "core_count"):
        v = getattr(dev, attr, None)
        if isinstance(v, int) and v > 0:
            return max(1, min(2, v))
    return 1


def _per_step_bytes(N, D, d_ff, mm_bytes):
    """Conservative per-row / fixed VMEM footprint model incl. 128-lane padding."""
    Dp, Fp, Np = _round_up(D, 128), _round_up(d_ff, 128), _round_up(N, 128)
    per_row = (2 * 2 * Dp * 4          # double-buffered x / out I/O blocks
               + 6 * Dp * 4            # f32 intermediates with D in the lane dim
               + Fp * 4                # FFN hidden row
               + Np * 4)               # attention score / prob row
    fixed = 2 * (_round_up(D, 8) * Dp * 4              # PeriodNorm matrix
                 + _round_up(D, 8) * Fp * mm_bytes     # fc1 weight
                 + _round_up(d_ff, 8) * Dp * mm_bytes  # fc2 weight
                 + 8 * Fp * 4 + 8 * Dp * 4)            # biases / LN vectors
    return per_row, fixed


def _pick_block_groups(G, N, per_row, fixed, num_cores):
    """Largest divisor of G whose block fits the VMEM budget; on 2-TC chips
    prefer an even step count with >= 2 steps per core."""
    divs = [d for d in range(1, G + 1) if G % d == 0]
    avail = max(VMEM_BUDGET - fixed, per_row * N)
    max_rows = max(N, avail // per_row)
    fitting = [d for d in divs if d * N <= max_rows] or [1]
    tg = max(fitting)
    if num_cores > 1:
        good = [d for d in fitting
                if (G // d) % num_cores == 0 and (G // d) >= 2 * num_cores]
        if not good:
            good = [d for d in fitting if (G // d) % num_cores == 0]
        if good:
            tg = max(good)
    return tg


def _rep_spec(shape):
    n = len(shape)
    return pl.BlockSpec(shape, lambda *args, n=n: (0,) * n)


def int_attention_forward(x, params, stable_len=8, block_groups=None,
                          matmul_dtype=jnp.bfloat16):
    B, C, N, D = x.shape
    d_ff = params["w1"].shape[0]
    G = B * C
    xf = x.reshape(G, N, D)

    mm_bytes = jnp.dtype(matmul_dtype).itemsize
    per_row, fixed = _per_step_bytes(N, D, d_ff, mm_bytes)
    TG = block_groups or _pick_block_groups(G, N, per_row, fixed, _num_tensorcores())
    assert G % TG == 0, (G, TG)

    wpn = _period_norm_matrix(D, stable_len)            # PeriodNorm as a matmul (f32)
    w1t = params["w1"].T.astype(matmul_dtype)           # (D, d_ff), transposed on host
    w2t = params["w2"].T.astype(matmul_dtype)           # (d_ff, D)
    zero = jnp.zeros((1, D), jnp.float32)
    vecs = jnp.concatenate([params["b2"], params["g1"], params["be1"],
                            params["g2"], params["be2"], zero, zero, zero], axis=0)

    out = pl.pallas_call(
        int_attention_kernel,
        out_shape=jax.ShapeDtypeStruct((G, N, D), x.dtype),
        grid=(G // TG,),
        in_specs=[
            pl.BlockSpec((TG, N, D), lambda i: (i, 0, 0)),  # x block
            _rep_spec((D, D)),        # PeriodNorm matrix (f32)
            _rep_spec((D, d_ff)),     # fc1 weight (pre-transposed, matmul dtype)
            _rep_spec((1, d_ff)),     # fc1 bias (f32)
            _rep_spec((d_ff, D)),     # fc2 weight (pre-transposed, matmul dtype)
            _rep_spec((8, D)),        # [b2, g1, be1, g2, be2, pad...] (f32)
        ],
        out_specs=pl.BlockSpec((TG, N, D), lambda i: (i, 0, 0)),
        compiler_params=pltpu.CompilerParams(
            dimension_semantics=("parallel",),
            vmem_limit_bytes=VMEM_LIMIT),
    )(xf, wpn, w1t, params["b1"], w2t, vecs)
    return out.reshape(B, C, N, D)


# ----------------------------- pure-JAX reference ---------------------------

def _period_norm_ref(x, L):
    D = x.shape[-1]
    sl = [x[..., L - 1 - i: D - i] for i in range(L)]
    ma = jnp.stack(sl, axis=-1).mean(-1)                   # (..., D - L + 1)
    pad = jnp.repeat(ma[..., :1], L - 1, axis=-1)          # left replicate pad
    mean = jnp.concatenate([pad, ma], axis=-1)             # (..., D)
    return x - mean


def reference(x, params, stable_len):
    B, C, N, D = x.shape
    xf = x.reshape(B * C, N, D)
    qk = _period_norm_ref(xf, stable_len)
    s = jnp.einsum('gnd,gmd->gnm', qk, qk) / math.sqrt(D)
    attn = jax.nn.softmax(s, axis=-1)
    x1 = xf + jnp.einsum('gnm,gmd->gnd', attn, xf)

    def ln(t, g, b):
        mu = t.mean(-1, keepdims=True)
        var = ((t - mu) ** 2).mean(-1, keepdims=True)
        return (t - mu) / jnp.sqrt(var + EPS) * g + b

    x2 = ln(x1, params["g1"], params["be1"])
    h = jax.nn.relu(x2 @ params["w1"].T + params["b1"])
    y = h @ params["w2"].T + params["b2"]
    out = ln(x2 + y, params["g2"], params["be2"])
    return out.reshape(B, C, N, D)


if __name__ == "__main__":
    B, C = 2, 4          # batch, channels
    N = 16               # tokens per channel
    D = 32               # d_model
    d_ff = 4 * D         # PyTorch default: d_ff = 4 * d_model
    stable_len = 8       # PeriodNorm window

    key = jax.random.PRNGKey(0)
    ks = jax.random.split(key, 9)
    x = jax.random.normal(ks[0], (B, C, N, D), dtype=jnp.float32)

    params = {
        "w1": jax.random.normal(ks[1], (d_ff, D), jnp.float32) * 0.05,
        "b1": jax.random.normal(ks[2], (1, d_ff), jnp.float32) * 0.05,
        "w2": jax.random.normal(ks[3], (D, d_ff), jnp.float32) * 0.05,
        "b2": jax.random.normal(ks[4], (1, D), jnp.float32) * 0.05,
        "g1": 1.0 + 0.1 * jax.random.normal(ks[5], (1, D), jnp.float32),
        "be1": 0.1 * jax.random.normal(ks[6], (1, D), jnp.float32),
        "g2": 1.0 + 0.1 * jax.random.normal(ks[7], (1, D), jnp.float32),
        "be2": 0.1 * jax.random.normal(ks[8], (1, D), jnp.float32),
    }

    ref = reference(x, params, stable_len)

    # 1) exact-semantics check: f32 MXU operands.
    out_f32 = jax.block_until_ready(
        int_attention_forward(x, params, stable_len=stable_len,
                              matmul_dtype=jnp.float32))
    assert out_f32.shape == (B, C, N, D)
    err_f32 = float(jnp.max(jnp.abs(out_f32 - ref)))
    assert jnp.allclose(out_f32, ref, atol=5e-3, rtol=5e-3), err_f32

    # 2) perf config (default): bf16 MXU operands, f32 accumulation / elementwise.
    out_bf16 = jax.block_until_ready(
        int_attention_forward(x, params, stable_len=stable_len))
    assert out_bf16.shape == (B, C, N, D)
    err_bf16 = float(jnp.max(jnp.abs(out_bf16 - ref)))
    assert jnp.allclose(out_bf16, ref, atol=3e-2, rtol=3e-2), err_bf16

    print("KERNEL_OK")
</pallas_src>

<mosaic_0001>
module attributes {stable_mosaic.version = 11 : i64} {
  func.func @int_attention_kernel(%arg0: i32, %arg1: memref<8x16x32xf32, #tpu.memory_space<vmem>>, %arg2: memref<32x32xf32, #tpu.memory_space<vmem>>, %arg3: memref<32x128xf32, #tpu.memory_space<vmem>>, %arg4: memref<1x128xf32, #tpu.memory_space<vmem>>, %arg5: memref<128x32xf32, #tpu.memory_space<vmem>>, %arg6: memref<8x32xf32, #tpu.memory_space<vmem>>, %arg7: memref<8x16x32xf32, #tpu.memory_space<vmem>>) attributes {dimension_semantics = [#tpu.dimension_semantics<parallel>], iteration_bounds = array<i64: 1>, scalar_prefetch = 0 : i64, scratch_operands = 0 : i64, tpu.core_type = #tpu.core_type<tc>, window_params = [{transform_indices = @transform_0, window_bounds = array<i64: 8, 16, 32>}, {pipeline_mode = #tpu.pipeline_mode<synchronous>, transform_indices = @transform_1, window_bounds = array<i64: 32, 32>}, {pipeline_mode = #tpu.pipeline_mode<synchronous>, transform_indices = @transform_2, window_bounds = array<i64: 32, 128>}, {pipeline_mode = #tpu.pipeline_mode<synchronous>, transform_indices = @transform_3, window_bounds = array<i64: 1, 128>}, {pipeline_mode = #tpu.pipeline_mode<synchronous>, transform_indices = @transform_4, window_bounds = array<i64: 128, 32>}, {pipeline_mode = #tpu.pipeline_mode<synchronous>, transform_indices = @transform_5, window_bounds = array<i64: 8, 32>}, {transform_indices = @transform_6, window_bounds = array<i64: 8, 16, 32>}]} {
    %c0 = arith.constant 0 : index
    %c0_0 = arith.constant 0 : index
    %c0_1 = arith.constant 0 : index
    %0 = vector.load %arg1[%c0, %c0_0, %c0_1] : memref<8x16x32xf32, #tpu.memory_space<vmem>>, vector<8x16x32xf32>
    %1 = vector.shape_cast %0 : vector<8x16x32xf32> to vector<128x32xf32>
    %c0_2 = arith.constant 0 : index
    %c0_3 = arith.constant 0 : index
    %2 = vector.load %arg2[%c0_2, %c0_3] : memref<32x32xf32, #tpu.memory_space<vmem>>, vector<32x32xf32>
    %cst = arith.constant dense<0.000000e+00> : vector<128x32xf32>
    %3 = tpu.matmul %1, %2, %cst {dimension_numbers = #tpu.dot_dimension_numbers<[1], [0], [0], [1], [0, 0, 1, 1], [], []>} : vector<128x32xf32>, vector<32x32xf32>, vector<128x32xf32> -> vector<128x32xf32>
    %4 = vector.shape_cast %3 : vector<128x32xf32> to vector<8x16x32xf32>
    "tpu.trace_start"() <{level = 10 : i32, message = "gnd,gmd->gnm"}> : () -> ()
    %cst_4 = arith.constant dense<0.000000e+00> : vector<8x16x16xf32>
    %5 = tpu.matmul %4, %4, %cst_4 {dimension_numbers = #tpu.dot_dimension_numbers<[2], [2], [1], [1], [0, 0, 0, 1, 1, 1], [0], [0]>} : vector<8x16x32xf32>, vector<8x16x32xf32>, vector<8x16x16xf32> -> vector<8x16x16xf32>
    "tpu.trace_stop"() : () -> ()
    %cst_5 = arith.constant 0.176776692 : f32
    %6 = vector.broadcast %cst_5 : f32 to vector<8x16x16xf32>
    %7 = arith.mulf %5, %6 : vector<8x16x16xf32>
    %cst_6 = arith.constant dense<0xFF800000> : vector<8x16xf32>
    %8 = vector.multi_reduction <maximumf>, %7, %cst_6 [2] : vector<8x16x16xf32> to vector<8x16xf32>
    %9 = vector.shape_cast %8 : vector<8x16xf32> to vector<8x16x1xf32>
    %10 = vector.broadcast %9 : vector<8x16x1xf32> to vector<8x16x16xf32>
    %11 = arith.subf %7, %10 : vector<8x16x16xf32>
    %12 = math.exp %11 : vector<8x16x16xf32>
    %cst_7 = arith.constant dense<0.000000e+00> : vector<8x16xf32>
    %13 = vector.multi_reduction <add>, %12, %cst_7 [2] : vector<8x16x16xf32> to vector<8x16xf32>
    %14 = vector.shape_cast %13 : vector<8x16xf32> to vector<8x16x1xf32>
    %15 = tpu.reciprocal %14 {approx = true} : vector<8x16x1xf32> -> vector<8x16x1xf32>
    %16 = vector.broadcast %15 : vector<8x16x1xf32> to vector<8x16x16xf32>
    %17 = arith.mulf %12, %16 : vector<8x16x16xf32>
    "tpu.trace_start"() <{level = 10 : i32, message = "gnm,gmd->gnd"}> : () -> ()
    %cst_8 = arith.constant dense<0.000000e+00> : vector<8x16x32xf32>
    %18 = tpu.matmul %17, %0, %cst_8 {dimension_numbers = #tpu.dot_dimension_numbers<[2], [1], [1], [2], [0, 0, 0, 1, 1, 2], [0], [0]>} : vector<8x16x16xf32>, vector<8x16x32xf32>, vector<8x16x32xf32> -> vector<8x16x32xf32>
    "tpu.trace_stop"() : () -> ()
    %c0_9 = arith.constant 0 : index
    %c0_10 = arith.constant 0 : index
    %19 = vector.load %arg6[%c0_9, %c0_10] : memref<8x32xf32, #tpu.memory_space<vmem>>, vector<8x32xf32>
    %20 = vector.extract_strided_slice %19 {offsets = [0, 0], sizes = [1, 32], strides = [1, 1]} : vector<8x32xf32> to vector<1x32xf32>
    %21 = vector.extract_strided_slice %19 {offsets = [1, 0], sizes = [1, 32], strides = [1, 1]} : vector<8x32xf32> to vector<1x32xf32>
    %22 = vector.extract_strided_slice %19 {offsets = [2, 0], sizes = [1, 32], strides = [1, 1]} : vector<8x32xf32> to vector<1x32xf32>
    %23 = vector.extract_strided_slice %19 {offsets = [3, 0], sizes = [1, 32], strides = [1, 1]} : vector<8x32xf32> to vector<1x32xf32>
    %24 = vector.extract_strided_slice %19 {offsets = [4, 0], sizes = [1, 32], strides = [1, 1]} : vector<8x32xf32> to vector<1x32xf32>
    %25 = arith.addf %0, %18 : vector<8x16x32xf32>
    %26 = vector.shape_cast %25 : vector<8x16x32xf32> to vector<128x32xf32>
    %cst_11 = arith.constant dense<0.000000e+00> : vector<128xf32>
    %27 = vector.multi_reduction <add>, %26, %cst_11 [1] : vector<128x32xf32> to vector<128xf32>
    %28 = vector.shape_cast %27 : vector<128xf32> to vector<128x1xf32>
    %cst_12 = arith.constant 3.200000e+01 : f32
    %29 = vector.broadcast %cst_12 : f32 to vector<128x1xf32>
    %30 = arith.divf %28, %29 : vector<128x1xf32>
    %31 = vector.broadcast %30 : vector<128x1xf32> to vector<128x32xf32>
    %32 = arith.subf %26, %31 : vector<128x32xf32>
    %33 = arith.mulf %32, %32 : vector<128x32xf32>
    %cst_13 = arith.constant dense<0.000000e+00> : vector<128xf32>
    %34 = vector.multi_reduction <add>, %33, %cst_13 [1] : vector<128x32xf32> to vector<128xf32>
    %35 = vector.shape_cast %34 : vector<128xf32> to vector<128x1xf32>
    %cst_14 = arith.constant 3.200000e+01 : f32
    %36 = vector.broadcast %cst_14 : f32 to vector<128x1xf32>
    %37 = arith.divf %35, %36 : vector<128x1xf32>
    %38 = vector.broadcast %30 : vector<128x1xf32> to vector<128x32xf32>
    %39 = arith.subf %26, %38 : vector<128x32xf32>
    %cst_15 = arith.constant 9.99999974E-6 : f32
    %40 = vector.broadcast %cst_15 : f32 to vector<128x1xf32>
    %41 = arith.addf %37, %40 : vector<128x1xf32>
    %42 = math.rsqrt %41 : vector<128x1xf32>
    %43 = vector.broadcast %42 : vector<128x1xf32> to vector<128x32xf32>
    %44 = arith.mulf %39, %43 : vector<128x32xf32>
    %45 = vector.broadcast %21 : vector<1x32xf32> to vector<128x32xf32>
    %46 = arith.mulf %44, %45 : vector<128x32xf32>
    %47 = vector.broadcast %22 : vector<1x32xf32> to vector<128x32xf32>
    %48 = arith.addf %46, %47 : vector<128x32xf32>
    %c0_16 = arith.constant 0 : index
    %c0_17 = arith.constant 0 : index
    %49 = vector.load %arg3[%c0_16, %c0_17] : memref<32x128xf32, #tpu.memory_space<vmem>>, vector<32x128xf32>
    %cst_18 = arith.constant dense<0.000000e+00> : vector<128x128xf32>
    %50 = tpu.matmul %48, %49, %cst_18 {dimension_numbers = #tpu.dot_dimension_numbers<[1], [0], [0], [1], [0, 0, 1, 1], [], []>} : vector<128x32xf32>, vector<32x128xf32>, vector<128x128xf32> -> vector<128x128xf32>
    %c0_19 = arith.constant 0 : index
    %c0_20 = arith.constant 0 : index
    %51 = vector.load %arg4[%c0_19, %c0_20] : memref<1x128xf32, #tpu.memory_space<vmem>>, vector<1x128xf32>
    %52 = vector.broadcast %51 : vector<1x128xf32> to vector<128x128xf32>
    %53 = arith.addf %50, %52 : vector<128x128xf32>
    %cst_21 = arith.constant 0.000000e+00 : f32
    %54 = vector.broadcast %cst_21 : f32 to vector<128x128xf32>
    %55 = arith.maximumf %53, %54 : vector<128x128xf32>
    %c0_22 = arith.constant 0 : index
    %c0_23 = arith.constant 0 : index
    %56 = vector.load %arg5[%c0_22, %c0_23] : memref<128x32xf32, #tpu.memory_space<vmem>>, vector<128x32xf32>
    %cst_24 = arith.constant dense<0.000000e+00> : vector<128x32xf32>
    %57 = tpu.matmul %55, %56, %cst_24 {dimension_numbers = #tpu.dot_dimension_numbers<[1], [0], [0], [1], [0, 0, 1, 1], [], []>} : vector<128x128xf32>, vector<128x32xf32>, vector<128x32xf32> -> vector<128x32xf32>
    %58 = vector.broadcast %20 : vector<1x32xf32> to vector<128x32xf32>
    %59 = arith.addf %57, %58 : vector<128x32xf32>
    %60 = arith.addf %48, %59 : vector<128x32xf32>
    %cst_25 = arith.constant dense<0.000000e+00> : vector<128xf32>
    %61 = vector.multi_reduction <add>, %60, %cst_25 [1] : vector<128x32xf32> to vector<128xf32>
    %62 = vector.shape_cast %61 : vector<128xf32> to vector<128x1xf32>
    %cst_26 = arith.constant 3.200000e+01 : f32
    %63 = vector.broadcast %cst_26 : f32 to vector<128x1xf32>
    %64 = arith.divf %62, %63 : vector<128x1xf32>
    %65 = vector.broadcast %64 : vector<128x1xf32> to vector<128x32xf32>
    %66 = arith.subf %60, %65 : vector<128x32xf32>
    %67 = arith.mulf %66, %66 : vector<128x32xf32>
    %cst_27 = arith.constant dense<0.000000e+00> : vector<128xf32>
    %68 = vector.multi_reduction <add>, %67, %cst_27 [1] : vector<128x32xf32> to vector<128xf32>
    %69 = vector.shape_cast %68 : vector<128xf32> to vector<128x1xf32>
    %cst_28 = arith.constant 3.200000e+01 : f32
    %70 = vector.broadcast %cst_28 : f32 to vector<128x1xf32>
    %71 = arith.divf %69, %70 : vector<128x1xf32>
    %72 = vector.broadcast %64 : vector<128x1xf32> to vector<128x32xf32>
    %73 = arith.subf %60, %72 : vector<128x32xf32>
    %cst_29 = arith.constant 9.99999974E-6 : f32
    %74 = vector.broadcast %cst_29 : f32 to vector<128x1xf32>
    %75 = arith.addf %71, %74 : vector<128x1xf32>
    %76 = math.rsqrt %75 : vector<128x1xf32>
    %77 = vector.broadcast %76 : vector<128x1xf32> to vector<128x32xf32>
    %78 = arith.mulf %73, %77 : vector<128x32xf32>
    %79 = vector.broadcast %23 : vector<1x32xf32> to vector<128x32xf32>
    %80 = arith.mulf %78, %79 : vector<128x32xf32>
    %81 = vector.broadcast %24 : vector<1x32xf32> to vector<128x32xf32>
    %82 = arith.addf %80, %81 : vector<128x32xf32>
    %83 = vector.shape_cast %82 : vector<128x32xf32> to vector<8x16x32xf32>
    %c0_30 = arith.constant 0 : index
    %c0_31 = arith.constant 0 : index
    %c0_32 = arith.constant 0 : index
    %84 = vector.load %arg7[%c0_30, %c0_31, %c0_32] : memref<8x16x32xf32, #tpu.memory_space<vmem>>, vector<8x16x32xf32>
    tpu.vector_store %arg7[%c0_30, %c0_31, %c0_32], %83 {strides = array<i32>} : memref<8x16x32xf32, #tpu.memory_space<vmem>>, vector<8x16x32xf32>,
    return
  }
  func.func @transform_0(%arg0: i32) -> (i32, i32, i32) {
    %c0_i32 = arith.constant 0 : i32
    %c0_i32_0 = arith.constant 0 : i32
    %c0_i32_1 = arith.constant 0 : i32
    return %arg0, %c0_i32, %c0_i32_0 : i32, i32, i32
  }
  func.func @transform_1(%arg0: i32) -> (i32, i32) {
    %c0_i32 = arith.constant 0 : i32
    %c0_i32_0 = arith.constant 0 : i32
    %c0_i32_1 = arith.constant 0 : i32
    return %c0_i32, %c0_i32_0 : i32, i32
  }
  func.func @transform_2(%arg0: i32) -> (i32, i32) {
    %c0_i32 = arith.constant 0 : i32
    %c0_i32_0 = arith.constant 0 : i32
    %c0_i32_1 = arith.constant 0 : i32
    return %c0_i32, %c0_i32_0 : i32, i32
  }
  func.func @transform_3(%arg0: i32) -> (i32, i32) {
    %c0_i32 = arith.constant 0 : i32
    %c0_i32_0 = arith.constant 0 : i32
    %c0_i32_1 = arith.constant 0 : i32
    return %c0_i32, %c0_i32_0 : i32, i32
  }
  func.func @transform_4(%arg0: i32) -> (i32, i32) {
    %c0_i32 = arith.constant 0 : i32
    %c0_i32_0 = arith.constant 0 : i32
    %c0_i32_1 = arith.constant 0 : i32
    return %c0_i32, %c0_i32_0 : i32, i32
  }
  func.func @transform_5(%arg0: i32) -> (i32, i32) {
    %c0_i32 = arith.constant 0 : i32
    %c0_i32_0 = arith.constant 0 : i32
    %c0_i32_1 = arith.constant 0 : i32
    return %c0_i32, %c0_i32_0 : i32, i32
  }
  func.func @transform_6(%arg0: i32) -> (i32, i32, i32) {
    %c0_i32 = arith.constant 0 : i32
    %c0_i32_0 = arith.constant 0 : i32
    %c0_i32_1 = arith.constant 0 : i32
    return %arg0, %c0_i32, %c0_i32_0 : i32, i32, i32
  }
}

</mosaic_0001>

<llo_original>
// kernel: tpu_custom_call.1
$region0: #{tpu_custom_call.1}
  #allocation0 [shape = 'u32[]', space=smem, size = 0x4, offset = 0x4, fixed_abs, tag = 'smem constant byte address 0x4 - core index']
  #allocation1 [shape = 'u32[72,128]{1,0:T(1,128)}', space=vmem, size = 0x9000, scoped, tag = 'internal scratch']
  %s0 = inlined_call_operand.vmem [shape: f32[8,16,32], index: 0, kind: input, shape index: {}]
  %s1 = inlined_call_operand.vmem [shape: f32[32,32], index: 1, kind: input, shape index: {}]
  %s2 = inlined_call_operand.hbm [shape: f32[32,128], index: 2, kind: input, shape index: {}]
  %s3 = inlined_call_operand.vmem [shape: f32[1,128], index: 3, kind: input, shape index: {}]
  %s4 = inlined_call_operand.vmem [shape: f32[128,32], index: 4, kind: input, shape index: {}]
  %s5 = inlined_call_operand.hbm [shape: f32[8,32], index: 5, kind: input, shape index: {}]
  %s6 = inlined_call_operand.hbm [shape: f32[8,16,32], index: 6, kind: output, shape index: {}]
  %s7 = sld [smem:[#allocation0]]
  $region42: #{tpu_custom_call.1} parent=0
    _
  %s9 = ssub.s32 1, %s7
  %s10 = scalar_select 0, %s9, %s7
  $region1: #{tpu_custom_call.1} parent=0
    #allocation2 [shape = 'u8[16384]{0}', space=vmem, size = 0x4000, scoped, tag = 'input window, operand 2, single buffered']
    #allocation3 [shape = 's32[1]{0}', space=sflag, size = 0x4, scoped, tag = 'scoped memory for tpu_custom_call.1']
    #allocation4 [shape = 's32[1]{0}', space=sflag, size = 0x4, scoped, tag = 'scoped memory for tpu_custom_call.1']
    #allocation5 [shape = 'u8[4096]{0}', space=vmem, size = 0x1000, scoped, tag = 'input window, operand 5, single buffered']
    #allocation6 [shape = 's32[1]{0}', space=sflag, size = 0x4, scoped, tag = 'scoped memory for tpu_custom_call.1']
    #allocation7 [shape = 'u8[65536]{0}', space=vmem, size = 0x10000, scoped, tag = 'output window, operand 0, single buffered']
    %11 = vsyncpa [#allocation3], 0
    %12 = vsyncpa [#allocation6], 0
    %13 = vsyncpa [#allocation4], 0
    // Predicated region
    $region2: #{tpu_custom_call.1} parent=1 // pred_check
      _
    $region3: #{tpu_custom_call.1} parent=1 // pred_check_branch
      %15 = sbr.rel (0) target = $region5
    $region4: #{tpu_custom_call.1} parent=1 // pred_region
      _
    $region5: #{tpu_custom_call.1} parent=1 // pred_fallthru
      _
    // Predicated region
    $region6: #{tpu_custom_call.1} parent=1 // pred_check
      _
    $region7: #{tpu_custom_call.1} parent=1 // pred_check_branch
      %17 = sbr.rel (0) target = $region9
    $region8: #{tpu_custom_call.1} parent=1 // pred_region
      _
    $region9: #{tpu_custom_call.1} parent=1 // pred_fallthru
      _
    // Predicated region
    $region10: #{tpu_custom_call.1} parent=1 // pred_check
      _
    $region11: #{tpu_custom_call.1} parent=1 // pred_check_branch
      %19 = sbr.rel (0) target = $region13
    $region12: #{tpu_custom_call.1} parent=1 // pred_region
      %21 = vsyncadd [#allocation3], 0
      %s22 = sshll.u32 %s2, 4
      %s23 = int_to_ptr.hbm [resolvable:$true] %s22
      %s24 = sshll.u32 [#allocation2], 4
      %s25 = int_to_ptr.vmem [resolvable:$true] %s24
      %30 = dma.hbm_to_vmem [thread:$0]  %s23, 512, %s25, [#allocation3], 128, 128, 8
    $region13: #{tpu_custom_call.1} parent=1 // pred_fallthru
      _
    // Predicated region
    $region14: #{tpu_custom_call.1} parent=1 // pred_check
      _
    $region15: #{tpu_custom_call.1} parent=1 // pred_check_branch
      %32 = sbr.rel (0) target = $region17
    $region16: #{tpu_custom_call.1} parent=1 // pred_region
      _
    $region17: #{tpu_custom_call.1} parent=1 // pred_fallthru
      _
    // Predicated region
    $region18: #{tpu_custom_call.1} parent=1 // pred_check
      _
    $region19: #{tpu_custom_call.1} parent=1 // pred_check_branch
      %34 = sbr.rel (0) target = $region21
    $region20: #{tpu_custom_call.1} parent=1 // pred_region
      _
    $region21: #{tpu_custom_call.1} parent=1 // pred_fallthru
      _
    // Predicated region
    $region22: #{tpu_custom_call.1} parent=1 // pred_check
      _
    $region23: #{tpu_custom_call.1} parent=1 // pred_check_branch
      %36 = sbr.rel (0) target = $region25
    $region24: #{tpu_custom_call.1} parent=1 // pred_region
      %38 = vsyncadd [#allocation6], 0
      %s40 = sshll.u32 %s5, 4
      %s41 = int_to_ptr.hbm [resolvable:$true] %s40
      %s42 = sshll.u32 [#allocation5], 4
      %s43 = int_to_ptr.vmem [resolvable:$true] %s42
      %45 = dma.hbm_to_vmem [thread:$0]  %s41, 128, %s43, [#allocation6]
    $region25: #{tpu_custom_call.1} parent=1 // pred_fallthru
      _
    // Predicated region
    $region26: #{tpu_custom_call.1} parent=1 // pred_check
      _
    $region27: #{tpu_custom_call.1} parent=1 // pred_check_branch
      %47 = sbr.rel (0) target = $region29
    $region28: #{tpu_custom_call.1} parent=1 // pred_region
      %49 = dma.done [#allocation3], 512
    $region29: #{tpu_custom_call.1} parent=1 // pred_fallthru
      _
    // Predicated region
    $region30: #{tpu_custom_call.1} parent=1 // pred_check
      _
    $region31: #{tpu_custom_call.1} parent=1 // pred_check_branch
      %51 = sbr.rel (0) target = $region33
    $region32: #{tpu_custom_call.1} parent=1 // pred_region
      %53 = dma.done [#allocation6], 128
    $region33: #{tpu_custom_call.1} parent=1 // pred_fallthru
      _
    %v54 = vld [vmem:[%s0] sm:$0xff]
    %v55 = vld [vmem:[%s0 + $0x8] sm:$0xff]
    %v56 = vld [vmem:[%s0 + $0x10] sm:$0xff]
    %v57 = vld [vmem:[%s0 + $0x18] sm:$0xff]
    %v58 = vld [vmem:[%s0 + $0x20] sm:$0xff]
    %v59 = vld [vmem:[%s0 + $0x28] sm:$0xff]
    %v60 = vld [vmem:[%s0 + $0x30] sm:$0xff]
    %v61 = vld [vmem:[%s0 + $0x38] sm:$0xff]
    %v62 = vld [vmem:[%s0 + $0x40] sm:$0xff]
    %v63 = vld [vmem:[%s0 + $0x48] sm:$0xff]
    %v64 = vld [vmem:[%s0 + $0x50] sm:$0xff]
    %v65 = vld [vmem:[%s0 + $0x58] sm:$0xff]
    %v66 = vld [vmem:[%s0 + $0x60] sm:$0xff]
    %v67 = vld [vmem:[%s0 + $0x68] sm:$0xff]
    %v68 = vld [vmem:[%s0 + $0x70] sm:$0xff]
    %v69 = vld [vmem:[%s0 + $0x78] sm:$0xff]
    %v70 = vld [vmem:[%s1] sm:$0xff]
    %v71 = vld [vmem:[%s1 + $0x8] sm:$0xff]
    %v72 = vld [vmem:[%s1 + $0x10] sm:$0xff]
    %v73 = vld [vmem:[%s1 + $0x18] sm:$0xff]
    %vm74 = vcmask 261120
    %v76 = vsel %vm74, %v54, 0
    %v79 = vsel %vm74, %v55, 0
    %v82 = vsel %vm74, %v56, 0
    %v85 = vsel %vm74, %v57, 0
    %v88 = vsel %vm74, %v58, 0
    %v91 = vsel %vm74, %v59, 0
    %v94 = vsel %vm74, %v60, 0
    %v97 = vsel %vm74, %v61, 0
    %v100 = vsel %vm74, %v62, 0
    %v103 = vsel %vm74, %v63, 0
    %v106 = vsel %vm74, %v64, 0
    %v109 = vsel %vm74, %v65, 0
    %v112 = vsel %vm74, %v66, 0
    %v115 = vsel %vm74, %v67, 0
    %v118 = vsel %vm74, %v68, 0
    %v121 = vsel %vm74, %v69, 0
    %123 = vmatpush.msra.mxu0 0.0
    %124 = vmatpush.msra.mxu0 0.0
    %125 = vmatpush.msra.mxu0 0.0
    %126 = vmatpush.msra.mxu0 0.0
    %127 = vmatpush.msra.mxu0 0.0
    %128 = vmatpush.msra.mxu0 0.0
    %129 = vmatpush.msra.mxu0 0.0
    %130 = vmatpush.msra.mxu0 0.0
    %131 = vmatpush.msra.mxu0 0.0
    %132 = vmatpush.msra.mxu0 0.0
    %133 = vmatpush.msra.mxu0 0.0
    %134 = vmatpush.msra.mxu0 0.0
    %135 = vmatpush.msra.mxu0 %v73
    %136 = vmatpush.msra.mxu0 %v72
    %137 = vmatpush.msra.mxu0 %v71
    %138 = vmatpush.msra.mxu0 %v70
    %139 = vmatmul.f32.gmra.mxu0 %v76
    %v140 = vpop.f32.mrf.mxu0
    %v141 = vadd.f32 0.0, %v140
    %142 = vmatmul.f32.gmra.mxu0 %v79
    %v143 = vpop.f32.mrf.mxu0
    %v144 = vadd.f32 0.0, %v143
    %145 = vmatmul.f32.gmra.mxu0 %v82
    %v146 = vpop.f32.mrf.mxu0
    %v147 = vadd.f32 0.0, %v146
    %148 = vmatmul.f32.gmra.mxu0 %v85
    %v149 = vpop.f32.mrf.mxu0
    %v150 = vadd.f32 0.0, %v149
    %151 = vmatmul.f32.gmra.mxu0 %v88
    %v152 = vpop.f32.mrf.mxu0
    %v153 = vadd.f32 0.0, %v152
    %154 = vmatmul.f32.gmra.mxu0 %v91
    %v155 = vpop.f32.mrf.mxu0
    %v156 = vadd.f32 0.0, %v155
    %157 = vmatmul.f32.gmra.mxu0 %v94
    %v158 = vpop.f32.mrf.mxu0
    %v159 = vadd.f32 0.0, %v158
    %160 = vmatmul.f32.gmra.mxu0 %v97
    %v161 = vpop.f32.mrf.mxu0
    %v162 = vadd.f32 0.0, %v161
    %163 = vmatmul.f32.gmra.mxu0 %v100
    %v164 = vpop.f32.mrf.mxu0
    %v165 = vadd.f32 0.0, %v164
    %166 = vmatmul.f32.gmra.mxu0 %v103
    %v167 = vpop.f32.mrf.mxu0
    %v168 = vadd.f32 0.0, %v167
    %169 = vmatmul.f32.gmra.mxu0 %v106
    %v170 = vpop.f32.mrf.mxu0
    %v171 = vadd.f32 0.0, %v170
    %172 = vmatmul.f32.gmra.mxu0 %v109
    %v173 = vpop.f32.mrf.mxu0
    %v174 = vadd.f32 0.0, %v173
    %175 = vmatmul.f32.gmra.mxu0 %v112
    %v176 = vpop.f32.mrf.mxu0
    %v177 = vadd.f32 0.0, %v176
    %178 = vmatmul.f32.gmra.mxu0 %v115
    %v179 = vpop.f32.mrf.mxu0
    %v180 = vadd.f32 0.0, %v179
    %181 = vmatmul.f32.gmra.mxu0 %v118
    %v182 = vpop.f32.mrf.mxu0
    %v183 = vadd.f32 0.0, %v182
    %184 = vmatmul.f32.gmra.mxu0 %v121
    %v185 = vpop.f32.mrf.mxu0
    %v186 = vadd.f32 0.0, %v185
    %187 = vdwg.mxu0
    %v189 = vsel %vm74, %v141, 0
    %v192 = vsel %vm74, %v144, 0
    %194 = vmatpush.xpose.msra.mxu0 0.0
    %195 = vmatpush.xpose.msra.mxu0 0.0
    %196 = vmatpush.xpose.msra.mxu0 0.0
    %197 = vmatpush.xpose.msra.mxu0 0.0
    %198 = vmatpush.xpose.msra.mxu0 0.0
    %199 = vmatpush.xpose.msra.mxu0 0.0
    %200 = vmatpush.xpose.msra.mxu0 0.0
    %201 = vmatpush.xpose.msra.mxu0 0.0
    %202 = vmatpush.xpose.msra.mxu0 0.0
    %203 = vmatpush.xpose.msra.mxu0 0.0
    %204 = vmatpush.xpose.msra.mxu0 0.0
    %205 = vmatpush.xpose.msra.mxu0 0.0
    %206 = vmatpush.xpose.msra.mxu0 0.0
    %207 = vmatpush.xpose.msra.mxu0 0.0
    %208 = vmatpush.xpose.msra.mxu0 %v192
    %209 = vmatpush.xpose.msra.mxu0 %v189
    %210 = vmatmul.f32.gmra.mxu0 %v189
    %v211 = vpop.f32.mrf.mxu0
    %v212 = vadd.f32 0.0, %v211
    %213 = vmatmul.f32.gmra.mxu0 %v192
    %v214 = vpop.f32.mrf.mxu0
    %v215 = vadd.f32 0.0, %v214
    %216 = vdwg.mxu0
    %v218 = vsel %vm74, %v147, 0
    %v221 = vsel %vm74, %v150, 0
    %223 = vmatpush.xpose.msra.mxu0 0.0
    %224 = vmatpush.xpose.msra.mxu0 0.0
    %225 = vmatpush.xpose.msra.mxu0 0.0
    %226 = vmatpush.xpose.msra.mxu0 0.0
    %227 = vmatpush.xpose.msra.mxu0 0.0
    %228 = vmatpush.xpose.msra.mxu0 0.0
    %229 = vmatpush.xpose.msra.mxu0 0.0
    %230 = vmatpush.xpose.msra.mxu0 0.0
    %231 = vmatpush.xpose.msra.mxu0 0.0
    %232 = vmatpush.xpose.msra.mxu0 0.0
    %233 = vmatpush.xpose.msra.mxu0 0.0
    %234 = vmatpush.xpose.msra.mxu0 0.0
    %235 = vmatpush.xpose.msra.mxu0 0.0
    %236 = vmatpush.xpose.msra.mxu0 0.0
    %237 = vmatpush.xpose.msra.mxu0 %v221
    %238 = vmatpush.xpose.msra.mxu0 %v218
    %239 = vmatmul.f32.gmra.mxu0 %v218
    %v240 = vpop.f32.mrf.mxu0
    %v241 = vadd.f32 0.0, %v240
    %242 = vmatmul.f32.gmra.mxu0 %v221
    %v243 = vpop.f32.mrf.mxu0
    %v244 = vadd.f32 0.0, %v243
    %245 = vdwg.mxu0
    %v247 = vsel %vm74, %v153, 0
    %v250 = vsel %vm74, %v156, 0
    %252 = vmatpush.xpose.msra.mxu0 0.0
    %253 = vmatpush.xpose.msra.mxu0 0.0
    %254 = vmatpush.xpose.msra.mxu0 0.0
    %255 = vmatpush.xpose.msra.mxu0 0.0
    %256 = vmatpush.xpose.msra.mxu0 0.0
    %257 = vmatpush.xpose.msra.mxu0 0.0
    %258 = vmatpush.xpose.msra.mxu0 0.0
    %259 = vmatpush.xpose.msra.mxu0 0.0
    %260 = vmatpush.xpose.msra.mxu0 0.0
    %261 = vmatpush.xpose.msra.mxu0 0.0
    %262 = vmatpush.xpose.msra.mxu0 0.0
    %263 = vmatpush.xpose.msra.mxu0 0.0
    %264 = vmatpush.xpose.msra.mxu0 0.0
    %265 = vmatpush.xpose.msra.mxu0 0.0
    %266 = vmatpush.xpose.msra.mxu0 %v250
    %267 = vmatpush.xpose.msra.mxu0 %v247
    %268 = vmatmul.f32.gmra.mxu0 %v247
    %v269 = vpop.f32.mrf.mxu0
    %v270 = vadd.f32 0.0, %v269
    %271 = vmatmul.f32.gmra.mxu0 %v250
    %v272 = vpop.f32.mrf.mxu0
    %v273 = vadd.f32 0.0, %v272
    %274 = vdwg.mxu0
    %v276 = vsel %vm74, %v159, 0
    %v279 = vsel %vm74, %v162, 0
    %281 = vmatpush.xpose.msra.mxu0 0.0
    %282 = vmatpush.xpose.msra.mxu0 0.0
    %283 = vmatpush.xpose.msra.mxu0 0.0
    %284 = vmatpush.xpose.msra.mxu0 0.0
    %285 = vmatpush.xpose.msra.mxu0 0.0
    %286 = vmatpush.xpose.msra.mxu0 0.0
    %287 = vmatpush.xpose.msra.mxu0 0.0
    %288 = vmatpush.xpose.msra.mxu0 0.0
    %289 = vmatpush.xpose.msra.mxu0 0.0
    %290 = vmatpush.xpose.msra.mxu0 0.0
    %291 = vmatpush.xpose.msra.mxu0 0.0
    %292 = vmatpush.xpose.msra.mxu0 0.0
    %293 = vmatpush.xpose.msra.mxu0 0.0
    %294 = vmatpush.xpose.msra.mxu0 0.0
    %295 = vmatpush.xpose.msra.mxu0 %v279
    %296 = vmatpush.xpose.msra.mxu0 %v276
    %297 = vmatmul.f32.gmra.mxu0 %v276
    %v298 = vpop.f32.mrf.mxu0
    %v299 = vadd.f32 0.0, %v298
    %300 = vmatmul.f32.gmra.mxu0 %v279
    %v301 = vpop.f32.mrf.mxu0
    %v302 = vadd.f32 0.0, %v301
    %303 = vdwg.mxu0
    %v305 = vsel %vm74, %v165, 0
    %v308 = vsel %vm74, %v168, 0
    %310 = vmatpush.xpose.msra.mxu0 0.0
    %311 = vmatpush.xpose.msra.mxu0 0.0
    %312 = vmatpush.xpose.msra.mxu0 0.0
    %313 = vmatpush.xpose.msra.mxu0 0.0
    %314 = vmatpush.xpose.msra.mxu0 0.0
    %315 = vmatpush.xpose.msra.mxu0 0.0
    %316 = vmatpush.xpose.msra.mxu0 0.0
    %317 = vmatpush.xpose.msra.mxu0 0.0
    %318 = vmatpush.xpose.msra.mxu0 0.0
    %319 = vmatpush.xpose.msra.mxu0 0.0
    %320 = vmatpush.xpose.msra.mxu0 0.0
    %321 = vmatpush.xpose.msra.mxu0 0.0
    %322 = vmatpush.xpose.msra.mxu0 0.0
    %323 = vmatpush.xpose.msra.mxu0 0.0
    %324 = vmatpush.xpose.msra.mxu0 %v308
    %325 = vmatpush.xpose.msra.mxu0 %v305
    %326 = vmatmul.f32.gmra.mxu0 %v305
    %v327 = vpop.f32.mrf.mxu0
    %v328 = vadd.f32 0.0, %v327
    %329 = vmatmul.f32.gmra.mxu0 %v308
    %v330 = vpop.f32.mrf.mxu0
    %v331 = vadd.f32 0.0, %v330
    %332 = vdwg.mxu0
    %v334 = vsel %vm74, %v171, 0
    %v337 = vsel %vm74, %v174, 0
    %339 = vmatpush.xpose.msra.mxu0 0.0
    %340 = vmatpush.xpose.msra.mxu0 0.0
    %341 = vmatpush.xpose.msra.mxu0 0.0
    %342 = vmatpush.xpose.msra.mxu0 0.0
    %343 = vmatpush.xpose.msra.mxu0 0.0
    %344 = vmatpush.xpose.msra.mxu0 0.0
    %345 = vmatpush.xpose.msra.mxu0 0.0
    %346 = vmatpush.xpose.msra.mxu0 0.0
    %347 = vmatpush.xpose.msra.mxu0 0.0
    %348 = vmatpush.xpose.msra.mxu0 0.0
    %349 = vmatpush.xpose.msra.mxu0 0.0
    %350 = vmatpush.xpose.msra.mxu0 0.0
    %351 = vmatpush.xpose.msra.mxu0 0.0
    %352 = vmatpush.xpose.msra.mxu0 0.0
    %353 = vmatpush.xpose.msra.mxu0 %v337
    %354 = vmatpush.xpose.msra.mxu0 %v334
    %355 = vmatmul.f32.gmra.mxu0 %v334
    %v356 = vpop.f32.mrf.mxu0
    %v357 = vadd.f32 0.0, %v356
    %358 = vmatmul.f32.gmra.mxu0 %v337
    %v359 = vpop.f32.mrf.mxu0
    %v360 = vadd.f32 0.0, %v359
    %361 = vdwg.mxu0
    %v363 = vsel %vm74, %v177, 0
    %v366 = vsel %vm74, %v180, 0
    %368 = vmatpush.xpose.msra.mxu0 0.0
    %369 = vmatpush.xpose.msra.mxu0 0.0
    %370 = vmatpush.xpose.msra.mxu0 0.0
    %371 = vmatpush.xpose.msra.mxu0 0.0
    %372 = vmatpush.xpose.msra.mxu0 0.0
    %373 = vmatpush.xpose.msra.mxu0 0.0
    %374 = vmatpush.xpose.msra.mxu0 0.0
    %375 = vmatpush.xpose.msra.mxu0 0.0
    %376 = vmatpush.xpose.msra.mxu0 0.0
    %377 = vmatpush.xpose.msra.mxu0 0.0
    %378 = vmatpush.xpose.msra.mxu0 0.0
    %379 = vmatpush.xpose.msra.mxu0 0.0
    %380 = vmatpush.xpose.msra.mxu0 0.0
    %381 = vmatpush.xpose.msra.mxu0 0.0
    %382 = vmatpush.xpose.msra.mxu0 %v366
    %383 = vmatpush.xpose.msra.mxu0 %v363
    %384 = vmatmul.f32.gmra.mxu0 %v363
    %v385 = vpop.f32.mrf.mxu0
    %v386 = vadd.f32 0.0, %v385
    %387 = vmatmul.f32.gmra.mxu0 %v366
    %v388 = vpop.f32.mrf.mxu0
    %v389 = vadd.f32 0.0, %v388
    %390 = vdwg.mxu0
    %v392 = vsel %vm74, %v183, 0
    %v395 = vsel %vm74, %v186, 0
    %397 = vmatpush.xpose.msra.mxu0 0.0
    %398 = vmatpush.xpose.msra.mxu0 0.0
    %399 = vmatpush.xpose.msra.mxu0 0.0
    %400 = vmatpush.xpose.msra.mxu0 0.0
    %401 = vmatpush.xpose.msra.mxu0 0.0
    %402 = vmatpush.xpose.msra.mxu0 0.0
    %403 = vmatpush.xpose.msra.mxu0 0.0
    %404 = vmatpush.xpose.msra.mxu0 0.0
    %405 = vmatpush.xpose.msra.mxu0 0.0
    %406 = vmatpush.xpose.msra.mxu0 0.0
    %407 = vmatpush.xpose.msra.mxu0 0.0
    %408 = vmatpush.xpose.msra.mxu0 0.0
    %409 = vmatpush.xpose.msra.mxu0 0.0
    %410 = vmatpush.xpose.msra.mxu0 0.0
    %411 = vmatpush.xpose.msra.mxu0 %v395
    %412 = vmatpush.xpose.msra.mxu0 %v392
    %413 = vmatmul.f32.gmra.mxu0 %v392
    %v414 = vpop.f32.mrf.mxu0
    %v415 = vadd.f32 0.0, %v414
    %416 = vmatmul.f32.gmra.mxu0 %v395
    %v417 = vpop.f32.mrf.mxu0
    %v418 = vadd.f32 0.0, %v417
    %419 = vdwg.mxu0
    %v420 = vmul.f32 %v212, 0.17677669
    %v421 = vmul.f32 %v215, 0.17677669
    %v422 = vmul.f32 %v241, 0.17677669
    %v423 = vmul.f32 %v244, 0.17677669
    %v424 = vmul.f32 %v270, 0.17677669
    %v425 = vmul.f32 %v273, 0.17677669
    %v426 = vmul.f32 %v299, 0.17677669
    %v427 = vmul.f32 %v302, 0.17677669
    %v428 = vmul.f32 %v328, 0.17677669
    %v429 = vmul.f32 %v331, 0.17677669
    %v430 = vmul.f32 %v357, 0.17677669
    %v431 = vmul.f32 %v360, 0.17677669
    %v432 = vmul.f32 %v386, 0.17677669
    %v433 = vmul.f32 %v389, 0.17677669
    %v434 = vmul.f32 %v415, 0.17677669
    %v435 = vmul.f32 %v418, 0.17677669
    %vm436 = vcmask 130048
    %v437 = vsel %vm436, %v420, -inf
    %438 = vmax.xlane.f32.xlu0 %v437
    %v439 = vpop.xlane.xlu0 %438
    %v440 = vsel %vm436, %v421, -inf
    %441 = vmax.xlane.f32.xlu0 %v440
    %v442 = vpop.xlane.xlu0 %441
    %v443 = vsel %vm436, %v422, -inf
    %444 = vmax.xlane.f32.xlu0 %v443
    %v445 = vpop.xlane.xlu0 %444
    %v446 = vsel %vm436, %v423, -inf
    %447 = vmax.xlane.f32.xlu0 %v446
    %v448 = vpop.xlane.xlu0 %447
    %v449 = vsel %vm436, %v424, -inf
    %450 = vmax.xlane.f32.xlu0 %v449
    %v451 = vpop.xlane.xlu0 %450
    %v452 = vsel %vm436, %v425, -inf
    %453 = vmax.xlane.f32.xlu0 %v452
    %v454 = vpop.xlane.xlu0 %453
    %v455 = vsel %vm436, %v426, -inf
    %456 = vmax.xlane.f32.xlu0 %v455
    %v457 = vpop.xlane.xlu0 %456
    %v458 = vsel %vm436, %v427, -inf
    %459 = vmax.xlane.f32.xlu0 %v458
    %v460 = vpop.xlane.xlu0 %459
    %v461 = vsel %vm436, %v428, -inf
    %462 = vmax.xlane.f32.xlu0 %v461
    %v463 = vpop.xlane.xlu0 %462
    %v464 = vsel %vm436, %v429, -inf
    %465 = vmax.xlane.f32.xlu0 %v464
    %v466 = vpop.xlane.xlu0 %465
    %v467 = vsel %vm436, %v430, -inf
    %468 = vmax.xlane.f32.xlu0 %v467
    %v469 = vpop.xlane.xlu0 %468
    %v470 = vsel %vm436, %v431, -inf
    %471 = vmax.xlane.f32.xlu0 %v470
    %v472 = vpop.xlane.xlu0 %471
    %v473 = vsel %vm436, %v432, -inf
    %474 = vmax.xlane.f32.xlu0 %v473
    %v475 = vpop.xlane.xlu0 %474
    %v476 = vsel %vm436, %v433, -inf
    %477 = vmax.xlane.f32.xlu0 %v476
    %v478 = vpop.xlane.xlu0 %477
    %v479 = vsel %vm436, %v434, -inf
    %480 = vmax.xlane.f32.xlu0 %v479
    %v481 = vpop.xlane.xlu0 %480
    %v482 = vsel %vm436, %v435, -inf
    %483 = vmax.xlane.f32.xlu0 %v482
    %v484 = vpop.xlane.xlu0 %483
    %v485 = vsub.f32 %v420, %v439
    %v486 = vsub.f32 %v421, %v442
    %v487 = vsub.f32 %v422, %v445
    %v488 = vsub.f32 %v423, %v448
    %v489 = vsub.f32 %v424, %v451
    %v490 = vsub.f32 %v425, %v454
    %v491 = vsub.f32 %v426, %v457
    %v492 = vsub.f32 %v427, %v460
    %v493 = vsub.f32 %v428, %v463
    %v494 = vsub.f32 %v429, %v466
    %v495 = vsub.f32 %v430, %v469
    %v496 = vsub.f32 %v431, %v472
    %v497 = vsub.f32 %v432, %v475
    %v498 = vsub.f32 %v433, %v478
    %v499 = vsub.f32 %v434, %v481
    %v500 = vsub.f32 %v435, %v484
    %v501 = vmul.f32 %v485, 1.442695
    %v502 = vpow.pop %v501
    %v503 = vmul.f32 %v486, 1.442695
    %v504 = vpow.pop %v503
    %v505 = vmul.f32 %v487, 1.442695
    %v506 = vpow.pop %v505
    %v507 = vmul.f32 %v488, 1.442695
    %v508 = vpow.pop %v507
    %v509 = vmul.f32 %v489, 1.442695
    %v510 = vpow.pop %v509
    %v511 = vmul.f32 %v490, 1.442695
    %v512 = vpow.pop %v511
    %v513 = vmul.f32 %v491, 1.442695
    %v514 = vpow.pop %v513
    %v515 = vmul.f32 %v492, 1.442695
    %v516 = vpow.pop %v515
    %v517 = vmul.f32 %v493, 1.442695
    %v518 = vpow.pop %v517
    %v519 = vmul.f32 %v494, 1.442695
    %v520 = vpow.pop %v519
    %v521 = vmul.f32 %v495, 1.442695
    %v522 = vpow.pop %v521
    %v523 = vmul.f32 %v496, 1.442695
    %v524 = vpow.pop %v523
    %v525 = vmul.f32 %v497, 1.442695
    %v526 = vpow.pop %v525
    %v527 = vmul.f32 %v498, 1.442695
    %v528 = vpow.pop %v527
    %v529 = vmul.f32 %v499, 1.442695
    %v530 = vpow.pop %v529
    %v531 = vmul.f32 %v500, 1.442695
    %v532 = vpow.pop %v531
    %v533 = vsel %vm436, %v502, 0.0
    %534 = vadd.xlane.f32.xlu0 %v533
    %v535 = vpop.xlane.xlu0 %534
    %v536 = vsel %vm436, %v504, 0.0
    %537 = vadd.xlane.f32.xlu0 %v536
    %v538 = vpop.xlane.xlu0 %537
    %v539 = vsel %vm436, %v506, 0.0
    %540 = vadd.xlane.f32.xlu0 %v539
    %v541 = vpop.xlane.xlu0 %540
    %v542 = vsel %vm436, %v508, 0.0
    %543 = vadd.xlane.f32.xlu0 %v542
    %v544 = vpop.xlane.xlu0 %543
    %v545 = vsel %vm436, %v510, 0.0
    %546 = vadd.xlane.f32.xlu0 %v545
    %v547 = vpop.xlane.xlu0 %546
    %v548 = vsel %vm436, %v512, 0.0
    %549 = vadd.xlane.f32.xlu0 %v548
    %v550 = vpop.xlane.xlu0 %549
    %v551 = vsel %vm436, %v514, 0.0
    %552 = vadd.xlane.f32.xlu0 %v551
    %v553 = vpop.xlane.xlu0 %552
    %v554 = vsel %vm436, %v516, 0.0
    %555 = vadd.xlane.f32.xlu0 %v554
    %v556 = vpop.xlane.xlu0 %555
    %v557 = vsel %vm436, %v518, 0.0
    %558 = vadd.xlane.f32.xlu0 %v557
    %v559 = vpop.xlane.xlu0 %558
    %v560 = vsel %vm436, %v520, 0.0
    %561 = vadd.xlane.f32.xlu0 %v560
    %v562 = vpop.xlane.xlu0 %561
    %v563 = vsel %vm436, %v522, 0.0
    %564 = vadd.xlane.f32.xlu0 %v563
    %v565 = vpop.xlane.xlu0 %564
    %v566 = vsel %vm436, %v524, 0.0
    %567 = vadd.xlane.f32.xlu0 %v566
    %v568 = vpop.xlane.xlu0 %567
    %v569 = vsel %vm436, %v526, 0.0
    %570 = vadd.xlane.f32.xlu0 %v569
    %v571 = vpop.xlane.xlu0 %570
    %v572 = vsel %vm436, %v528, 0.0
    %573 = vadd.xlane.f32.xlu0 %v572
    %v574 = vpop.xlane.xlu0 %573
    %v575 = vsel %vm436, %v530, 0.0
    %576 = vadd.xlane.f32.xlu0 %v575
    %v577 = vpop.xlane.xlu0 %576
    %v578 = vsel %vm436, %v532, 0.0
    %579 = vadd.xlane.f32.xlu0 %v578
    %v580 = vpop.xlane.xlu0 %579
    %v581 = vrcp.pop %v535
    %v582 = vrcp.pop %v538
    %v583 = vrcp.pop %v541
    %v584 = vrcp.pop %v544
    %v585 = vrcp.pop %v547
    %v586 = vrcp.pop %v550
    %v587 = vrcp.pop %v553
    %v588 = vrcp.pop %v556
    %v589 = vrcp.pop %v559
    %v590 = vrcp.pop %v562
    %v591 = vrcp.pop %v565
    %v592 = vrcp.pop %v568
    %v593 = vrcp.pop %v571
    %v594 = vrcp.pop %v574
    %v595 = vrcp.pop %v577
    %v596 = vrcp.pop %v580
    %v597 = vmul.f32 %v502, %v581
    %v598 = vmul.f32 %v504, %v582
    %v599 = vmul.f32 %v506, %v583
    %v600 = vmul.f32 %v508, %v584
    %v601 = vmul.f32 %v510, %v585
    %v602 = vmul.f32 %v512, %v586
    %v603 = vmul.f32 %v514, %v587
    %v604 = vmul.f32 %v516, %v588
    %v605 = vmul.f32 %v518, %v589
    %v606 = vmul.f32 %v520, %v590
    %v607 = vmul.f32 %v522, %v591
    %v608 = vmul.f32 %v524, %v592
    %v609 = vmul.f32 %v526, %v593
    %v610 = vmul.f32 %v528, %v594
    %v611 = vmul.f32 %v530, %v595
    %v612 = vmul.f32 %v532, %v596
    %v614 = vsel %vm436, %v597, 0
    %v617 = vsel %vm436, %v598, 0
    %619 = vmatpush.msra.mxu0 0.0
    %620 = vmatpush.msra.mxu0 0.0
    %621 = vmatpush.msra.mxu0 0.0
    %622 = vmatpush.msra.mxu0 0.0
    %623 = vmatpush.msra.mxu0 0.0
    %624 = vmatpush.msra.mxu0 0.0
    %625 = vmatpush.msra.mxu0 0.0
    %626 = vmatpush.msra.mxu0 0.0
    %627 = vmatpush.msra.mxu0 0.0
    %628 = vmatpush.msra.mxu0 0.0
    %629 = vmatpush.msra.mxu0 0.0
    %630 = vmatpush.msra.mxu0 0.0
    %631 = vmatpush.msra.mxu0 0.0
    %632 = vmatpush.msra.mxu0 0.0
    %633 = vmatpush.msra.mxu0 %v55
    %634 = vmatpush.msra.mxu0 %v54
    %635 = vmatmul.f32.gmra.mxu0 %v614
    %v636 = vpop.f32.mrf.mxu0
    %v637 = vadd.f32 0.0, %v636
    %638 = vmatmul.f32.gmra.mxu0 %v617
    %v639 = vpop.f32.mrf.mxu0
    %v640 = vadd.f32 0.0, %v639
    %641 = vdwg.mxu0
    %v643 = vsel %vm436, %v599, 0
    %v646 = vsel %vm436, %v600, 0
    %648 = vmatpush.msra.mxu0 0.0
    %649 = vmatpush.msra.mxu0 0.0
    %650 = vmatpush.msra.mxu0 0.0
    %651 = vmatpush.msra.mxu0 0.0
    %652 = vmatpush.msra.mxu0 0.0
    %653 = vmatpush.msra.mxu0 0.0
    %654 = vmatpush.msra.mxu0 0.0
    %655 = vmatpush.msra.mxu0 0.0
    %656 = vmatpush.msra.mxu0 0.0
    %657 = vmatpush.msra.mxu0 0.0
    %658 = vmatpush.msra.mxu0 0.0
    %659 = vmatpush.msra.mxu0 0.0
    %660 = vmatpush.msra.mxu0 0.0
    %661 = vmatpush.msra.mxu0 0.0
    %662 = vmatpush.msra.mxu0 %v57
    %663 = vmatpush.msra.mxu0 %v56
    %664 = vmatmul.f32.gmra.mxu0 %v643
    %v665 = vpop.f32.mrf.mxu0
    %v666 = vadd.f32 0.0, %v665
    %667 = vmatmul.f32.gmra.mxu0 %v646
    %v668 = vpop.f32.mrf.mxu0
    %v669 = vadd.f32 0.0, %v668
    %670 = vdwg.mxu0
    %v672 = vsel %vm436, %v601, 0
    %v675 = vsel %vm436, %v602, 0
    %677 = vmatpush.msra.mxu0 0.0
    %678 = vmatpush.msra.mxu0 0.0
    %679 = vmatpush.msra.mxu0 0.0
    %680 = vmatpush.msra.mxu0 0.0
    %681 = vmatpush.msra.mxu0 0.0
    %682 = vmatpush.msra.mxu0 0.0
    %683 = vmatpush.msra.mxu0 0.0
    %684 = vmatpush.msra.mxu0 0.0
    %685 = vmatpush.msra.mxu0 0.0
    %686 = vmatpush.msra.mxu0 0.0
    %687 = vmatpush.msra.mxu0 0.0
    %688 = vmatpush.msra.mxu0 0.0
    %689 = vmatpush.msra.mxu0 0.0
    %690 = vmatpush.msra.mxu0 0.0
    %691 = vmatpush.msra.mxu0 %v59
    %692 = vmatpush.msra.mxu0 %v58
    %693 = vmatmul.f32.gmra.mxu0 %v672
    %v694 = vpop.f32.mrf.mxu0
    %v695 = vadd.f32 0.0, %v694
    %696 = vmatmul.f32.gmra.mxu0 %v675
    %v697 = vpop.f32.mrf.mxu0
    %v698 = vadd.f32 0.0, %v697
    %699 = vdwg.mxu0
    %v701 = vsel %vm436, %v603, 0
    %v704 = vsel %vm436, %v604, 0
    %706 = vmatpush.msra.mxu0 0.0
    %707 = vmatpush.msra.mxu0 0.0
    %708 = vmatpush.msra.mxu0 0.0
    %709 = vmatpush.msra.mxu0 0.0
    %710 = vmatpush.msra.mxu0 0.0
    %711 = vmatpush.msra.mxu0 0.0
    %712 = vmatpush.msra.mxu0 0.0
    %713 = vmatpush.msra.mxu0 0.0
    %714 = vmatpush.msra.mxu0 0.0
    %715 = vmatpush.msra.mxu0 0.0
    %716 = vmatpush.msra.mxu0 0.0
    %717 = vmatpush.msra.mxu0 0.0
    %718 = vmatpush.msra.mxu0 0.0
    %719 = vmatpush.msra.mxu0 0.0
    %720 = vmatpush.msra.mxu0 %v61
    %721 = vmatpush.msra.mxu0 %v60
    %722 = vmatmul.f32.gmra.mxu0 %v701
    %v723 = vpop.f32.mrf.mxu0
    %v724 = vadd.f32 0.0, %v723
    %725 = vmatmul.f32.gmra.mxu0 %v704
    %v726 = vpop.f32.mrf.mxu0
    %v727 = vadd.f32 0.0, %v726
    %728 = vdwg.mxu0
    %v730 = vsel %vm436, %v605, 0
    %v733 = vsel %vm436, %v606, 0
    %735 = vmatpush.msra.mxu0 0.0
    %736 = vmatpush.msra.mxu0 0.0
    %737 = vmatpush.msra.mxu0 0.0
    %738 = vmatpush.msra.mxu0 0.0
    %739 = vmatpush.msra.mxu0 0.0
    %740 = vmatpush.msra.mxu0 0.0
    %741 = vmatpush.msra.mxu0 0.0
    %742 = vmatpush.msra.mxu0 0.0
    %743 = vmatpush.msra.mxu0 0.0
    %744 = vmatpush.msra.mxu0 0.0
    %745 = vmatpush.msra.mxu0 0.0
    %746 = vmatpush.msra.mxu0 0.0
    %747 = vmatpush.msra.mxu0 0.0
    %748 = vmatpush.msra.mxu0 0.0
    %749 = vmatpush.msra.mxu0 %v63
    %750 = vmatpush.msra.mxu0 %v62
    %751 = vmatmul.f32.gmra.mxu0 %v730
    %v752 = vpop.f32.mrf.mxu0
    %v753 = vadd.f32 0.0, %v752
    %754 = vmatmul.f32.gmra.mxu0 %v733
    %v755 = vpop.f32.mrf.mxu0
    %v756 = vadd.f32 0.0, %v755
    %757 = vdwg.mxu0
    %v759 = vsel %vm436, %v607, 0
    %v762 = vsel %vm436, %v608, 0
    %764 = vmatpush.msra.mxu0 0.0
    %765 = vmatpush.msra.mxu0 0.0
    %766 = vmatpush.msra.mxu0 0.0
    %767 = vmatpush.msra.mxu0 0.0
    %768 = vmatpush.msra.mxu0 0.0
    %769 = vmatpush.msra.mxu0 0.0
    %770 = vmatpush.msra.mxu0 0.0
    %771 = vmatpush.msra.mxu0 0.0
    %772 = vmatpush.msra.mxu0 0.0
    %773 = vmatpush.msra.mxu0 0.0
    %774 = vmatpush.msra.mxu0 0.0
    %775 = vmatpush.msra.mxu0 0.0
    %776 = vmatpush.msra.mxu0 0.0
    %777 = vmatpush.msra.mxu0 0.0
    %778 = vmatpush.msra.mxu0 %v65
    %779 = vmatpush.msra.mxu0 %v64
    %780 = vmatmul.f32.gmra.mxu0 %v759
    %v781 = vpop.f32.mrf.mxu0
    %v782 = vadd.f32 0.0, %v781
    %783 = vmatmul.f32.gmra.mxu0 %v762
    %v784 = vpop.f32.mrf.mxu0
    %v785 = vadd.f32 0.0, %v784
    %786 = vdwg.mxu0
    %v788 = vsel %vm436, %v609, 0
    %v791 = vsel %vm436, %v610, 0
    %793 = vmatpush.msra.mxu0 0.0
    %794 = vmatpush.msra.mxu0 0.0
    %795 = vmatpush.msra.mxu0 0.0
    %796 = vmatpush.msra.mxu0 0.0
    %797 = vmatpush.msra.mxu0 0.0
    %798 = vmatpush.msra.mxu0 0.0
    %799 = vmatpush.msra.mxu0 0.0
    %800 = vmatpush.msra.mxu0 0.0
    %801 = vmatpush.msra.mxu0 0.0
    %802 = vmatpush.msra.mxu0 0.0
    %803 = vmatpush.msra.mxu0 0.0
    %804 = vmatpush.msra.mxu0 0.0
    %805 = vmatpush.msra.mxu0 0.0
    %806 = vmatpush.msra.mxu0 0.0
    %807 = vmatpush.msra.mxu0 %v67
    %808 = vmatpush.msra.mxu0 %v66
    %809 = vmatmul.f32.gmra.mxu0 %v788
    %v810 = vpop.f32.mrf.mxu0
    %v811 = vadd.f32 0.0, %v810
    %812 = vmatmul.f32.gmra.mxu0 %v791
    %v813 = vpop.f32.mrf.mxu0
    %v814 = vadd.f32 0.0, %v813
    %815 = vdwg.mxu0
    %v817 = vsel %vm436, %v611, 0
    %v820 = vsel %vm436, %v612, 0
    %822 = vmatpush.msra.mxu0 0.0
    %823 = vmatpush.msra.mxu0 0.0
    %824 = vmatpush.msra.mxu0 0.0
    %825 = vmatpush.msra.mxu0 0.0
    %826 = vmatpush.msra.mxu0 0.0
    %827 = vmatpush.msra.mxu0 0.0
    %828 = vmatpush.msra.mxu0 0.0
    %829 = vmatpush.msra.mxu0 0.0
    %830 = vmatpush.msra.mxu0 0.0
    %831 = vmatpush.msra.mxu0 0.0
    %832 = vmatpush.msra.mxu0 0.0
    %833 = vmatpush.msra.mxu0 0.0
    %834 = vmatpush.msra.mxu0 0.0
    %835 = vmatpush.msra.mxu0 0.0
    %836 = vmatpush.msra.mxu0 %v69
    %837 = vmatpush.msra.mxu0 %v68
    %838 = vmatmul.f32.gmra.mxu0 %v817
    %v839 = vpop.f32.mrf.mxu0
    %v840 = vadd.f32 0.0, %v839
    %841 = vmatmul.f32.gmra.mxu0 %v820
    %v842 = vpop.f32.mrf.mxu0
    %v843 = vadd.f32 0.0, %v842
    %844 = vdwg.mxu0
    %v845 = vld [vmem:[#allocation5] sm:$0xff]
    %v846 = vadd.f32 %v54, %v637
    %v847 = vadd.f32 %v55, %v640
    %v848 = vadd.f32 %v56, %v666
    %v849 = vadd.f32 %v57, %v669
    %v850 = vadd.f32 %v58, %v695
    %v851 = vadd.f32 %v59, %v698
    %v852 = vadd.f32 %v60, %v724
    %v853 = vadd.f32 %v61, %v727
    %v854 = vadd.f32 %v62, %v753
    %v855 = vadd.f32 %v63, %v756
    %v856 = vadd.f32 %v64, %v782
    %v857 = vadd.f32 %v65, %v785
    %v858 = vadd.f32 %v66, %v811
    %v859 = vadd.f32 %v67, %v814
    %v860 = vadd.f32 %v68, %v840
    %v861 = vadd.f32 %v69, %v843
    %v862 = vsel %vm74, %v846, 0.0
    %863 = vadd.xlane.f32.xlu0 %v862
    %v864 = vpop.xlane.xlu0 %863
    %v865 = vsel %vm74, %v847, 0.0
    %866 = vadd.xlane.f32.xlu0 %v865
    %v867 = vpop.xlane.xlu0 %866
    %v868 = vsel %vm74, %v848, 0.0
    %869 = vadd.xlane.f32.xlu0 %v868
    %v870 = vpop.xlane.xlu0 %869
    %v871 = vsel %vm74, %v849, 0.0
    %872 = vadd.xlane.f32.xlu0 %v871
    %v873 = vpop.xlane.xlu0 %872
    %v874 = vsel %vm74, %v850, 0.0
    %875 = vadd.xlane.f32.xlu0 %v874
    %v876 = vpop.xlane.xlu0 %875
    %v877 = vsel %vm74, %v851, 0.0
    %878 = vadd.xlane.f32.xlu0 %v877
    %v879 = vpop.xlane.xlu0 %878
    %v880 = vsel %vm74, %v852, 0.0
    %881 = vadd.xlane.f32.xlu0 %v880
    %v882 = vpop.xlane.xlu0 %881
    %v883 = vsel %vm74, %v853, 0.0
    %884 = vadd.xlane.f32.xlu0 %v883
    %v885 = vpop.xlane.xlu0 %884
    %v886 = vsel %vm74, %v854, 0.0
    %887 = vadd.xlane.f32.xlu0 %v886
    %v888 = vpop.xlane.xlu0 %887
    %v889 = vsel %vm74, %v855, 0.0
    %890 = vadd.xlane.f32.xlu0 %v889
    %v891 = vpop.xlane.xlu0 %890
    %v892 = vsel %vm74, %v856, 0.0
    %893 = vadd.xlane.f32.xlu0 %v892
    %v894 = vpop.xlane.xlu0 %893
    %v895 = vsel %vm74, %v857, 0.0
    %896 = vadd.xlane.f32.xlu0 %v895
    %v897 = vpop.xlane.xlu0 %896
    %v898 = vsel %vm74, %v858, 0.0
    %899 = vadd.xlane.f32.xlu0 %v898
    %v900 = vpop.xlane.xlu0 %899
    %v901 = vsel %vm74, %v859, 0.0
    %902 = vadd.xlane.f32.xlu0 %v901
    %v903 = vpop.xlane.xlu0 %902
    %v904 = vsel %vm74, %v860, 0.0
    %905 = vadd.xlane.f32.xlu0 %v904
    %v906 = vpop.xlane.xlu0 %905
    %v907 = vsel %vm74, %v861, 0.0
    %908 = vadd.xlane.f32.xlu0 %v907
    %v909 = vpop.xlane.xlu0 %908
    %v910 = vrcp.pop 32.0
    %v911 = vmul.f32 32.0, %v910
    %v912 = vsub.f32 1.0, %v911
    %v913 = vmul.f32 %v910, %v912
    %v914 = vadd.f32 %v910, %v913
    %vm915 = vweird.f32 %v910
    %v916 = vsel %vm915, %v910, %v914
    %v917 = vmul.f32 %v864, %v916
    %v918 = vmul.f32 %v867, %v916
    %v919 = vmul.f32 %v870, %v916
    %v920 = vmul.f32 %v873, %v916
    %v921 = vmul.f32 %v876, %v916
    %v922 = vmul.f32 %v879, %v916
    %v923 = vmul.f32 %v882, %v916
    %v924 = vmul.f32 %v885, %v916
    %v925 = vmul.f32 %v888, %v916
    %v926 = vmul.f32 %v891, %v916
    %v927 = vmul.f32 %v894, %v916
    %v928 = vmul.f32 %v897, %v916
    %v929 = vmul.f32 %v900, %v916
    %v930 = vmul.f32 %v903, %v916
    %v931 = vmul.f32 %v906, %v916
    %v932 = vmul.f32 %v909, %v916
    %v933 = vsub.f32 %v846, %v917
    %v934 = vsub.f32 %v847, %v918
    %v935 = vsub.f32 %v848, %v919
    %v936 = vsub.f32 %v849, %v920
    %v937 = vsub.f32 %v850, %v921
    %v938 = vsub.f32 %v851, %v922
    %v939 = vsub.f32 %v852, %v923
    %v940 = vsub.f32 %v853, %v924
    %v941 = vsub.f32 %v854, %v925
    %v942 = vsub.f32 %v855, %v926
    %v943 = vsub.f32 %v856, %v927
    %v944 = vsub.f32 %v857, %v928
    %v945 = vsub.f32 %v858, %v929
    %v946 = vsub.f32 %v859, %v930
    %v947 = vsub.f32 %v860, %v931
    %v948 = vsub.f32 %v861, %v932
    %v949 = vmul.f32 %v933, %v933
    %v950 = vmul.f32 %v934, %v934
    %v951 = vmul.f32 %v935, %v935
    %v952 = vmul.f32 %v936, %v936
    %v953 = vmul.f32 %v937, %v937
    %v954 = vmul.f32 %v938, %v938
    %v955 = vmul.f32 %v939, %v939
    %v956 = vmul.f32 %v940, %v940
    %v957 = vmul.f32 %v941, %v941
    %v958 = vmul.f32 %v942, %v942
    %v959 = vmul.f32 %v943, %v943
    %v960 = vmul.f32 %v944, %v944
    %v961 = vmul.f32 %v945, %v945
    %v962 = vmul.f32 %v946, %v946
    %v963 = vmul.f32 %v947, %v947
    %v964 = vmul.f32 %v948, %v948
    %v965 = vsel %vm74, %v949, 0.0
    %966 = vadd.xlane.f32.xlu0 %v965
    %v967 = vpop.xlane.xlu0 %966
    %v968 = vsel %vm74, %v950, 0.0
    %969 = vadd.xlane.f32.xlu0 %v968
    %v970 = vpop.xlane.xlu0 %969
    %v971 = vsel %vm74, %v951, 0.0
    %972 = vadd.xlane.f32.xlu0 %v971
    %v973 = vpop.xlane.xlu0 %972
    %v974 = vsel %vm74, %v952, 0.0
    %975 = vadd.xlane.f32.xlu0 %v974
    %v976 = vpop.xlane.xlu0 %975
    %v977 = vsel %vm74, %v953, 0.0
    %978 = vadd.xlane.f32.xlu0 %v977
    %v979 = vpop.xlane.xlu0 %978
    %v980 = vsel %vm74, %v954, 0.0
    %981 = vadd.xlane.f32.xlu0 %v980
    %v982 = vpop.xlane.xlu0 %981
    %v983 = vsel %vm74, %v955, 0.0
    %984 = vadd.xlane.f32.xlu0 %v983
    %v985 = vpop.xlane.xlu0 %984
    %v986 = vsel %vm74, %v956, 0.0
    %987 = vadd.xlane.f32.xlu0 %v986
    %v988 = vpop.xlane.xlu0 %987
    %v989 = vsel %vm74, %v957, 0.0
    %990 = vadd.xlane.f32.xlu0 %v989
    %v991 = vpop.xlane.xlu0 %990
    %v992 = vsel %vm74, %v958, 0.0
    %993 = vadd.xlane.f32.xlu0 %v992
    %v994 = vpop.xlane.xlu0 %993
    %v995 = vsel %vm74, %v959, 0.0
    %996 = vadd.xlane.f32.xlu0 %v995
    %v997 = vpop.xlane.xlu0 %996
    %v998 = vsel %vm74, %v960, 0.0
    %999 = vadd.xlane.f32.xlu0 %v998
    %v1000 = vpop.xlane.xlu0 %999
    %v1001 = vsel %vm74, %v961, 0.0
    %1002 = vadd.xlane.f32.xlu0 %v1001
    %v1003 = vpop.xlane.xlu0 %1002
    %v1004 = vsel %vm74, %v962, 0.0
    %1005 = vadd.xlane.f32.xlu0 %v1004
    %v1006 = vpop.xlane.xlu0 %1005
    %v1007 = vsel %vm74, %v963, 0.0
    %1008 = vadd.xlane.f32.xlu0 %v1007
    %v1009 = vpop.xlane.xlu0 %1008
    %v1010 = vsel %vm74, %v964, 0.0
    %1011 = vadd.xlane.f32.xlu0 %v1010
    %v1012 = vpop.xlane.xlu0 %1011
    %v1013 = vmul.f32 %v967, %v916
    %v1014 = vmul.f32 %v970, %v916
    %v1015 = vmul.f32 %v973, %v916
    %v1016 = vmul.f32 %v976, %v916
    %v1017 = vmul.f32 %v979, %v916
    %v1018 = vmul.f32 %v982, %v916
    %v1019 = vmul.f32 %v985, %v916
    %v1020 = vmul.f32 %v988, %v916
    %v1021 = vmul.f32 %v991, %v916
    %v1022 = vmul.f32 %v994, %v916
    %v1023 = vmul.f32 %v997, %v916
    %v1024 = vmul.f32 %v1000, %v916
    %v1025 = vmul.f32 %v1003, %v916
    %v1026 = vmul.f32 %v1006, %v916
    %v1027 = vmul.f32 %v1009, %v916
    %v1028 = vmul.f32 %v1012, %v916
    %v1029 = vadd.f32 %v1013, 1e-05
    %v1030 = vadd.f32 %v1014, 1e-05
    %v1031 = vadd.f32 %v1015, 1e-05
    %v1032 = vadd.f32 %v1016, 1e-05
    %v1033 = vadd.f32 %v1017, 1e-05
    %v1034 = vadd.f32 %v1018, 1e-05
    %v1035 = vadd.f32 %v1019, 1e-05
    %v1036 = vadd.f32 %v1020, 1e-05
    %v1037 = vadd.f32 %v1021, 1e-05
    %v1038 = vadd.f32 %v1022, 1e-05
    %v1039 = vadd.f32 %v1023, 1e-05
    %v1040 = vadd.f32 %v1024, 1e-05
    %v1041 = vadd.f32 %v1025, 1e-05
    %v1042 = vadd.f32 %v1026, 1e-05
    %v1043 = vadd.f32 %v1027, 1e-05
    %v1044 = vadd.f32 %v1028, 1e-05
    %v1045 = vrsqrt.pop %v1029
    %v1046 = vmul.f32 %v1045, %v1029
    %v1047 = vmul.f32 %v1046, %v1045
    %v1048 = vmul.f32 0.5, %v1047
    %v1049 = vsub.f32 1.5, %v1048
    %v1050 = vmul.f32 %v1045, %v1049
    %vm1051 = vweird.f32 %v1029
    %vm1052 = vweird.f32 %v1045
    %vm1053 = vmor %vm1051, %vm1052
    %v1054 = vsel %vm1053, %v1045, %v1050
    %v1055 = vrsqrt.pop %v1030
    %v1056 = vmul.f32 %v1055, %v1030
    %v1057 = vmul.f32 %v1056, %v1055
    %v1058 = vmul.f32 0.5, %v1057
    %v1059 = vsub.f32 1.5, %v1058
    %v1060 = vmul.f32 %v1055, %v1059
    %vm1061 = vweird.f32 %v1030
    %vm1062 = vweird.f32 %v1055
    %vm1063 = vmor %vm1061, %vm1062
    %v1064 = vsel %vm1063, %v1055, %v1060
    %v1065 = vrsqrt.pop %v1031
    %v1066 = vmul.f32 %v1065, %v1031
    %v1067 = vmul.f32 %v1066, %v1065
    %v1068 = vmul.f32 0.5, %v1067
    %v1069 = vsub.f32 1.5, %v1068
    %v1070 = vmul.f32 %v1065, %v1069
    %vm1071 = vweird.f32 %v1031
    %vm1072 = vweird.f32 %v1065
    %vm1073 = vmor %vm1071, %vm1072
    %v1074 = vsel %vm1073, %v1065, %v1070
    %v1075 = vrsqrt.pop %v1032
    %v1076 = vmul.f32 %v1075, %v1032
    %v1077 = vmul.f32 %v1076, %v1075
    %v1078 = vmul.f32 0.5, %v1077
    %v1079 = vsub.f32 1.5, %v1078
    %v1080 = vmul.f32 %v1075, %v1079
    %vm1081 = vweird.f32 %v1032
    %vm1082 = vweird.f32 %v1075
    %vm1083 = vmor %vm1081, %vm1082
    %v1084 = vsel %vm1083, %v1075, %v1080
    %v1085 = vrsqrt.pop %v1033
    %v1086 = vmul.f32 %v1085, %v1033
    %v1087 = vmul.f32 %v1086, %v1085
    %v1088 = vmul.f32 0.5, %v1087
    %v1089 = vsub.f32 1.5, %v1088
    %v1090 = vmul.f32 %v1085, %v1089
    %vm1091 = vweird.f32 %v1033
    %vm1092 = vweird.f32 %v1085
    %vm1093 = vmor %vm1091, %vm1092
    %v1094 = vsel %vm1093, %v1085, %v1090
    %v1095 = vrsqrt.pop %v1034
    %v1096 = vmul.f32 %v1095, %v1034
    %v1097 = vmul.f32 %v1096, %v1095
    %v1098 = vmul.f32 0.5, %v1097
    %v1099 = vsub.f32 1.5, %v1098
    %v1100 = vmul.f32 %v1095, %v1099
    %vm1101 = vweird.f32 %v1034
    %vm1102 = vweird.f32 %v1095
    %vm1103 = vmor %vm1101, %vm1102
    %v1104 = vsel %vm1103, %v1095, %v1100
    %v1105 = vrsqrt.pop %v1035
    %v1106 = vmul.f32 %v1105, %v1035
    %v1107 = vmul.f32 %v1106, %v1105
    %v1108 = vmul.f32 0.5, %v1107
    %v1109 = vsub.f32 1.5, %v1108
    %v1110 = vmul.f32 %v1105, %v1109
    %vm1111 = vweird.f32 %v1035
    %vm1112 = vweird.f32 %v1105
    %vm1113 = vmor %vm1111, %vm1112
    %v1114 = vsel %vm1113, %v1105, %v1110
    %v1115 = vrsqrt.pop %v1036
    %v1116 = vmul.f32 %v1115, %v1036
    %v1117 = vmul.f32 %v1116, %v1115
    %v1118 = vmul.f32 0.5, %v1117
    %v1119 = vsub.f32 1.5, %v1118
    %v1120 = vmul.f32 %v1115, %v1119
    %vm1121 = vweird.f32 %v1036
    %vm1122 = vweird.f32 %v1115
    %vm1123 = vmor %vm1121, %vm1122
    %v1124 = vsel %vm1123, %v1115, %v1120
    %v1125 = vrsqrt.pop %v1037
    %v1126 = vmul.f32 %v1125, %v1037
    %v1127 = vmul.f32 %v1126, %v1125
    %v1128 = vmul.f32 0.5, %v1127
    %v1129 = vsub.f32 1.5, %v1128
    %v1130 = vmul.f32 %v1125, %v1129
    %vm1131 = vweird.f32 %v1037
    %vm1132 = vweird.f32 %v1125
    %vm1133 = vmor %vm1131, %vm1132
    %v1134 = vsel %vm1133, %v1125, %v1130
    %v1135 = vrsqrt.pop %v1038
    %v1136 = vmul.f32 %v1135, %v1038
    %v1137 = vmul.f32 %v1136, %v1135
    %v1138 = vmul.f32 0.5, %v1137
    %v1139 = vsub.f32 1.5, %v1138
    %v1140 = vmul.f32 %v1135, %v1139
    %vm1141 = vweird.f32 %v1038
    %vm1142 = vweird.f32 %v1135
    %vm1143 = vmor %vm1141, %vm1142
    %v1144 = vsel %vm1143, %v1135, %v1140
    %v1145 = vrsqrt.pop %v1039
    %v1146 = vmul.f32 %v1145, %v1039
    %v1147 = vmul.f32 %v1146, %v1145
    %v1148 = vmul.f32 0.5, %v1147
    %v1149 = vsub.f32 1.5, %v1148
    %v1150 = vmul.f32 %v1145, %v1149
    %vm1151 = vweird.f32 %v1039
    %vm1152 = vweird.f32 %v1145
    %vm1153 = vmor %vm1151, %vm1152
    %v1154 = vsel %vm1153, %v1145, %v1150
    %v1155 = vrsqrt.pop %v1040
    %v1156 = vmul.f32 %v1155, %v1040
    %v1157 = vmul.f32 %v1156, %v1155
    %v1158 = vmul.f32 0.5, %v1157
    %v1159 = vsub.f32 1.5, %v1158
    %v1160 = vmul.f32 %v1155, %v1159
    %vm1161 = vweird.f32 %v1040
    %vm1162 = vweird.f32 %v1155
    %vm1163 = vmor %vm1161, %vm1162
    %v1164 = vsel %vm1163, %v1155, %v1160
    %v1165 = vrsqrt.pop %v1041
    %v1166 = vmul.f32 %v1165, %v1041
    %v1167 = vmul.f32 %v1166, %v1165
    %v1168 = vmul.f32 0.5, %v1167
    %v1169 = vsub.f32 1.5, %v1168
    %v1170 = vmul.f32 %v1165, %v1169
    %vm1171 = vweird.f32 %v1041
    %vm1172 = vweird.f32 %v1165
    %vm1173 = vmor %vm1171, %vm1172
    %v1174 = vsel %vm1173, %v1165, %v1170
    %v1175 = vrsqrt.pop %v1042
    %v1176 = vmul.f32 %v1175, %v1042
    %v1177 = vmul.f32 %v1176, %v1175
    %v1178 = vmul.f32 0.5, %v1177
    %v1179 = vsub.f32 1.5, %v1178
    %v1180 = vmul.f32 %v1175, %v1179
    %vm1181 = vweird.f32 %v1042
    %vm1182 = vweird.f32 %v1175
    %vm1183 = vmor %vm1181, %vm1182
    %v1184 = vsel %vm1183, %v1175, %v1180
    %v1185 = vrsqrt.pop %v1043
    %v1186 = vmul.f32 %v1185, %v1043
    %v1187 = vmul.f32 %v1186, %v1185
    %v1188 = vmul.f32 0.5, %v1187
    %v1189 = vsub.f32 1.5, %v1188
    %v1190 = vmul.f32 %v1185, %v1189
    %vm1191 = vweird.f32 %v1043
    %vm1192 = vweird.f32 %v1185
    %vm1193 = vmor %vm1191, %vm1192
    %v1194 = vsel %vm1193, %v1185, %v1190
    %v1195 = vrsqrt.pop %v1044
    %v1196 = vmul.f32 %v1195, %v1044
    %v1197 = vmul.f32 %v1196, %v1195
    %v1198 = vmul.f32 0.5, %v1197
    %v1199 = vsub.f32 1.5, %v1198
    %v1200 = vmul.f32 %v1195, %v1199
    %vm1201 = vweird.f32 %v1044
    %vm1202 = vweird.f32 %v1195
    %vm1203 = vmor %vm1201, %vm1202
    %v1204 = vsel %vm1203, %v1195, %v1200
    %v1205 = vmul.f32 %v933, %v1054
    %v1206 = vmul.f32 %v934, %v1064
    %v1207 = vmul.f32 %v935, %v1074
    %v1208 = vmul.f32 %v936, %v1084
    %v1209 = vmul.f32 %v937, %v1094
    %v1210 = vmul.f32 %v938, %v1104
    %v1211 = vmul.f32 %v939, %v1114
    %v1212 = vmul.f32 %v940, %v1124
    %v1213 = vmul.f32 %v941, %v1134
    %v1214 = vmul.f32 %v942, %v1144
    %v1215 = vmul.f32 %v943, %v1154
    %v1216 = vmul.f32 %v944, %v1164
    %v1217 = vmul.f32 %v945, %v1174
    %v1218 = vmul.f32 %v946, %v1184
    %v1219 = vmul.f32 %v947, %v1194
    %v1220 = vmul.f32 %v948, %v1204
    %v1221 = vperm.slane %v845, 1
    %v1222 = vmul.f32 %v1205, %v1221
    %v1223 = vmul.f32 %v1206, %v1221
    %v1224 = vmul.f32 %v1207, %v1221
    %v1225 = vmul.f32 %v1208, %v1221
    %v1226 = vmul.f32 %v1209, %v1221
    %v1227 = vmul.f32 %v1210, %v1221
    %v1228 = vmul.f32 %v1211, %v1221
    %v1229 = vmul.f32 %v1212, %v1221
    %v1230 = vmul.f32 %v1213, %v1221
    %v1231 = vmul.f32 %v1214, %v1221
    %v1232 = vmul.f32 %v1215, %v1221
    %v1233 = vmul.f32 %v1216, %v1221
    %v1234 = vmul.f32 %v1217, %v1221
    %v1235 = vmul.f32 %v1218, %v1221
    %v1236 = vmul.f32 %v1219, %v1221
    %v1237 = vmul.f32 %v1220, %v1221
    %v1238 = vperm.slane %v845, 2
    %v1239 = vadd.f32 %v1222, %v1238
    %v1240 = vadd.f32 %v1223, %v1238
    %v1241 = vadd.f32 %v1224, %v1238
    %v1242 = vadd.f32 %v1225, %v1238
    %v1243 = vadd.f32 %v1226, %v1238
    %v1244 = vadd.f32 %v1227, %v1238
    %v1245 = vadd.f32 %v1228, %v1238
    %v1246 = vadd.f32 %v1229, %v1238
    %v1247 = vadd.f32 %v1230, %v1238
    %v1248 = vadd.f32 %v1231, %v1238
    %v1249 = vadd.f32 %v1232, %v1238
    %v1250 = vadd.f32 %v1233, %v1238
    %v1251 = vadd.f32 %v1234, %v1238
    %v1252 = vadd.f32 %v1235, %v1238
    %v1253 = vadd.f32 %v1236, %v1238
    %v1254 = vadd.f32 %v1237, %v1238
    %v1255 = vld [vmem:[#allocation2] sm:$0xff]
    %v1256 = vld [vmem:[#allocation2 + $0x8] sm:$0xff]
    %v1257 = vld [vmem:[#allocation2 + $0x10] sm:$0xff]
    %v1258 = vld [vmem:[#allocation2 + $0x18] sm:$0xff]
    %v1259 = vld [vmem:[%s3] sm:$0x1]
    %v1261 = vperm.slane %v1259, 0
    %v1264 = vsel %vm74, %v1239, 0
    %v1267 = vsel %vm74, %v1240, 0
    %v1270 = vsel %vm74, %v1241, 0
    %v1273 = vsel %vm74, %v1242, 0
    %v1276 = vsel %vm74, %v1243, 0
    %v1279 = vsel %vm74, %v1244, 0
    %v1282 = vsel %vm74, %v1245, 0
    %v1285 = vsel %vm74, %v1246, 0
    %v1288 = vsel %vm74, %v1247, 0
    %v1291 = vsel %vm74, %v1248, 0
    %v1294 = vsel %vm74, %v1249, 0
    %v1297 = vsel %vm74, %v1250, 0
    %v1300 = vsel %vm74, %v1251, 0
    %v1303 = vsel %vm74, %v1252, 0
    %v1306 = vsel %vm74, %v1253, 0
    %v1309 = vsel %vm74, %v1254, 0
    %1311 = vmatpush.msra.mxu0 0.0
    %1312 = vmatpush.msra.mxu0 0.0
    %1313 = vmatpush.msra.mxu0 0.0
    %1314 = vmatpush.msra.mxu0 0.0
    %1315 = vmatpush.msra.mxu0 0.0
    %1316 = vmatpush.msra.mxu0 0.0
    %1317 = vmatpush.msra.mxu0 0.0
    %1318 = vmatpush.msra.mxu0 0.0
    %1319 = vmatpush.msra.mxu0 0.0
    %1320 = vmatpush.msra.mxu0 0.0
    %1321 = vmatpush.msra.mxu0 0.0
    %1322 = vmatpush.msra.mxu0 0.0
    %1323 = vmatpush.msra.mxu0 %v1258
    %1324 = vmatpush.msra.mxu0 %v1257
    %1325 = vmatpush.msra.mxu0 %v1256
    %1326 = vmatpush.msra.mxu0 %v1255
    %1327 = vmatmul.f32.gmra.mxu0 %v1264
    %v1328 = vpop.f32.mrf.mxu0
    %v1329 = vadd.f32 %v1261, %v1328
    %1330 = vmatmul.f32.gmra.mxu0 %v1267
    %v1331 = vpop.f32.mrf.mxu0
    %v1332 = vadd.f32 %v1261, %v1331
    %1333 = vmatmul.f32.gmra.mxu0 %v1270
    %v1334 = vpop.f32.mrf.mxu0
    %v1335 = vadd.f32 %v1261, %v1334
    %1336 = vmatmul.f32.gmra.mxu0 %v1273
    %v1337 = vpop.f32.mrf.mxu0
    %v1338 = vadd.f32 %v1261, %v1337
    %1339 = vmatmul.f32.gmra.mxu0 %v1276
    %v1340 = vpop.f32.mrf.mxu0
    %v1341 = vadd.f32 %v1261, %v1340
    %1342 = vmatmul.f32.gmra.mxu0 %v1279
    %v1343 = vpop.f32.mrf.mxu0
    %v1344 = vadd.f32 %v1261, %v1343
    %1345 = vmatmul.f32.gmra.mxu0 %v1282
    %v1346 = vpop.f32.mrf.mxu0
    %v1347 = vadd.f32 %v1261, %v1346
    %1348 = vmatmul.f32.gmra.mxu0 %v1285
    %v1349 = vpop.f32.mrf.mxu0
    %v1350 = vadd.f32 %v1261, %v1349
    %1351 = vmatmul.f32.gmra.mxu0 %v1288
    %v1352 = vpop.f32.mrf.mxu0
    %v1353 = vadd.f32 %v1261, %v1352
    %1354 = vmatmul.f32.gmra.mxu0 %v1291
    %v1355 = vpop.f32.mrf.mxu0
    %v1356 = vadd.f32 %v1261, %v1355
    %1357 = vmatmul.f32.gmra.mxu0 %v1294
    %v1358 = vpop.f32.mrf.mxu0
    %v1359 = vadd.f32 %v1261, %v1358
    %1360 = vmatmul.f32.gmra.mxu0 %v1297
    %v1361 = vpop.f32.mrf.mxu0
    %v1362 = vadd.f32 %v1261, %v1361
    %1363 = vmatmul.f32.gmra.mxu0 %v1300
    %v1364 = vpop.f32.mrf.mxu0
    %v1365 = vadd.f32 %v1261, %v1364
    %1366 = vmatmul.f32.gmra.mxu0 %v1303
    %v1367 = vpop.f32.mrf.mxu0
    %v1368 = vadd.f32 %v1261, %v1367
    %1369 = vmatmul.f32.gmra.mxu0 %v1306
    %v1370 = vpop.f32.mrf.mxu0
    %v1371 = vadd.f32 %v1261, %v1370
    %1372 = vmatmul.f32.gmra.mxu0 %v1309
    %v1373 = vpop.f32.mrf.mxu0
    %v1374 = vadd.f32 %v1261, %v1373
    %1375 = vdwg.mxu0
    %v1376 = vmax.f32 %v1329, 0.0
    %v1377 = vmax.f32 %v1332, 0.0
    %v1378 = vmax.f32 %v1335, 0.0
    %v1379 = vmax.f32 %v1338, 0.0
    %v1380 = vmax.f32 %v1341, 0.0
    %v1381 = vmax.f32 %v1344, 0.0
    %v1382 = vmax.f32 %v1347, 0.0
    %v1383 = vmax.f32 %v1350, 0.0
    %v1384 = vmax.f32 %v1353, 0.0
    %v1385 = vmax.f32 %v1356, 0.0
    %v1386 = vmax.f32 %v1359, 0.0
    %v1387 = vmax.f32 %v1362, 0.0
    %v1388 = vmax.f32 %v1365, 0.0
    %v1389 = vmax.f32 %v1368, 0.0
    %v1390 = vmax.f32 %v1371, 0.0
    %v1391 = vmax.f32 %v1374, 0.0
    %v1392 = vld [vmem:[%s4] sm:$0xff]
    %v1393 = vld [vmem:[%s4 + $0x8] sm:$0xff]
    %v1394 = vld [vmem:[%s4 + $0x10] sm:$0xff]
    %v1395 = vld [vmem:[%s4 + $0x18] sm:$0xff]
    %v1396 = vld [vmem:[%s4 + $0x20] sm:$0xff]
    %v1397 = vld [vmem:[%s4 + $0x28] sm:$0xff]
    %v1398 = vld [vmem:[%s4 + $0x30] sm:$0xff]
    %v1399 = vld [vmem:[%s4 + $0x38] sm:$0xff]
    %v1400 = vld [vmem:[%s4 + $0x40] sm:$0xff]
    %v1401 = vld [vmem:[%s4 + $0x48] sm:$0xff]
    %v1402 = vld [vmem:[%s4 + $0x50] sm:$0xff]
    %v1403 = vld [vmem:[%s4 + $0x58] sm:$0xff]
    %v1404 = vld [vmem:[%s4 + $0x60] sm:$0xff]
    %v1405 = vld [vmem:[%s4 + $0x68] sm:$0xff]
    %v1406 = vld [vmem:[%s4 + $0x70] sm:$0xff]
    %v1407 = vld [vmem:[%s4 + $0x78] sm:$0xff]
    %v1408 = vperm.slane %v845, 0
    %1409 = vmatpush.msra.mxu0 %v1407
    %1410 = vmatpush.msra.mxu0 %v1406
    %1411 = vmatpush.msra.mxu0 %v1405
    %1412 = vmatpush.msra.mxu0 %v1404
    %1413 = vmatpush.msra.mxu0 %v1403
    %1414 = vmatpush.msra.mxu0 %v1402
    %1415 = vmatpush.msra.mxu0 %v1401
    %1416 = vmatpush.msra.mxu0 %v1400
    %1417 = vmatpush.msra.mxu0 %v1399
    %1418 = vmatpush.msra.mxu0 %v1398
    %1419 = vmatpush.msra.mxu0 %v1397
    %1420 = vmatpush.msra.mxu0 %v1396
    %1421 = vmatpush.msra.mxu0 %v1395
    %1422 = vmatpush.msra.mxu0 %v1394
    %1423 = vmatpush.msra.mxu0 %v1393
    %1424 = vmatpush.msra.mxu0 %v1392
    %1425 = vmatmul.f32.gmra.mxu0 %v1376
    %v1426 = vpop.f32.mrf.mxu0
    %v1427 = vadd.f32 %v1408, %v1426
    %1428 = vmatmul.f32.gmra.mxu0 %v1377
    %v1429 = vpop.f32.mrf.mxu0
    %v1430 = vadd.f32 %v1408, %v1429
    %1431 = vmatmul.f32.gmra.mxu0 %v1378
    %v1432 = vpop.f32.mrf.mxu0
    %v1433 = vadd.f32 %v1408, %v1432
    %1434 = vmatmul.f32.gmra.mxu0 %v1379
    %v1435 = vpop.f32.mrf.mxu0
    %v1436 = vadd.f32 %v1408, %v1435
    %1437 = vmatmul.f32.gmra.mxu0 %v1380
    %v1438 = vpop.f32.mrf.mxu0
    %v1439 = vadd.f32 %v1408, %v1438
    %1440 = vmatmul.f32.gmra.mxu0 %v1381
    %v1441 = vpop.f32.mrf.mxu0
    %v1442 = vadd.f32 %v1408, %v1441
    %1443 = vmatmul.f32.gmra.mxu0 %v1382
    %v1444 = vpop.f32.mrf.mxu0
    %v1445 = vadd.f32 %v1408, %v1444
    %1446 = vmatmul.f32.gmra.mxu0 %v1383
    %v1447 = vpop.f32.mrf.mxu0
    %v1448 = vadd.f32 %v1408, %v1447
    %1449 = vmatmul.f32.gmra.mxu0 %v1384
    %v1450 = vpop.f32.mrf.mxu0
    %v1451 = vadd.f32 %v1408, %v1450
    %1452 = vmatmul.f32.gmra.mxu0 %v1385
    %v1453 = vpop.f32.mrf.mxu0
    %v1454 = vadd.f32 %v1408, %v1453
    %1455 = vmatmul.f32.gmra.mxu0 %v1386
    %v1456 = vpop.f32.mrf.mxu0
    %v1457 = vadd.f32 %v1408, %v1456
    %1458 = vmatmul.f32.gmra.mxu0 %v1387
    %v1459 = vpop.f32.mrf.mxu0
    %v1460 = vadd.f32 %v1408, %v1459
    %1461 = vmatmul.f32.gmra.mxu0 %v1388
    %v1462 = vpop.f32.mrf.mxu0
    %v1463 = vadd.f32 %v1408, %v1462
    %1464 = vmatmul.f32.gmra.mxu0 %v1389
    %v1465 = vpop.f32.mrf.mxu0
    %v1466 = vadd.f32 %v1408, %v1465
    %1467 = vmatmul.f32.gmra.mxu0 %v1390
    %v1468 = vpop.f32.mrf.mxu0
    %v1469 = vadd.f32 %v1408, %v1468
    %1470 = vmatmul.f32.gmra.mxu0 %v1391
    %v1471 = vpop.f32.mrf.mxu0
    %v1472 = vadd.f32 %v1408, %v1471
    %1473 = vdwg.mxu0
    %v1474 = vadd.f32 %v1239, %v1427
    %v1475 = vadd.f32 %v1240, %v1430
    %v1476 = vadd.f32 %v1241, %v1433
    %v1477 = vadd.f32 %v1242, %v1436
    %v1478 = vadd.f32 %v1243, %v1439
    %v1479 = vadd.f32 %v1244, %v1442
    %v1480 = vadd.f32 %v1245, %v1445
    %v1481 = vadd.f32 %v1246, %v1448
    %v1482 = vadd.f32 %v1247, %v1451
    %v1483 = vadd.f32 %v1248, %v1454
    %v1484 = vadd.f32 %v1249, %v1457
    %v1485 = vadd.f32 %v1250, %v1460
    %v1486 = vadd.f32 %v1251, %v1463
    %v1487 = vadd.f32 %v1252, %v1466
    %v1488 = vadd.f32 %v1253, %v1469
    %v1489 = vadd.f32 %v1254, %v1472
    %v1490 = vsel %vm74, %v1474, 0.0
    %1491 = vadd.xlane.f32.xlu0 %v1490
    %v1492 = vpop.xlane.xlu0 %1491
    %v1493 = vsel %vm74, %v1475, 0.0
    %1494 = vadd.xlane.f32.xlu0 %v1493
    %v1495 = vpop.xlane.xlu0 %1494
    %v1496 = vsel %vm74, %v1476, 0.0
    %1497 = vadd.xlane.f32.xlu0 %v1496
    %v1498 = vpop.xlane.xlu0 %1497
    %v1499 = vsel %vm74, %v1477, 0.0
    %1500 = vadd.xlane.f32.xlu0 %v1499
    %v1501 = vpop.xlane.xlu0 %1500
    %v1502 = vsel %vm74, %v1478, 0.0
    %1503 = vadd.xlane.f32.xlu0 %v1502
    %v1504 = vpop.xlane.xlu0 %1503
    %v1505 = vsel %vm74, %v1479, 0.0
    %1506 = vadd.xlane.f32.xlu0 %v1505
    %v1507 = vpop.xlane.xlu0 %1506
    %v1508 = vsel %vm74, %v1480, 0.0
    %1509 = vadd.xlane.f32.xlu0 %v1508
    %v1510 = vpop.xlane.xlu0 %1509
    %v1511 = vsel %vm74, %v1481, 0.0
    %1512 = vadd.xlane.f32.xlu0 %v1511
    %v1513 = vpop.xlane.xlu0 %1512
    %v1514 = vsel %vm74, %v1482, 0.0
    %1515 = vadd.xlane.f32.xlu0 %v1514
    %v1516 = vpop.xlane.xlu0 %1515
    %v1517 = vsel %vm74, %v1483, 0.0
    %1518 = vadd.xlane.f32.xlu0 %v1517
    %v1519 = vpop.xlane.xlu0 %1518
    %v1520 = vsel %vm74, %v1484, 0.0
    %1521 = vadd.xlane.f32.xlu0 %v1520
    %v1522 = vpop.xlane.xlu0 %1521
    %v1523 = vsel %vm74, %v1485, 0.0
    %1524 = vadd.xlane.f32.xlu0 %v1523
    %v1525 = vpop.xlane.xlu0 %1524
    %v1526 = vsel %vm74, %v1486, 0.0
    %1527 = vadd.xlane.f32.xlu0 %v1526
    %v1528 = vpop.xlane.xlu0 %1527
    %v1529 = vsel %vm74, %v1487, 0.0
    %1530 = vadd.xlane.f32.xlu0 %v1529
    %v1531 = vpop.xlane.xlu0 %1530
    %v1532 = vsel %vm74, %v1488, 0.0
    %1533 = vadd.xlane.f32.xlu0 %v1532
    %v1534 = vpop.xlane.xlu0 %1533
    %v1535 = vsel %vm74, %v1489, 0.0
    %1536 = vadd.xlane.f32.xlu0 %v1535
    %v1537 = vpop.xlane.xlu0 %1536
    %v1538 = vmul.f32 %v1492, %v916
    %v1539 = vmul.f32 %v1495, %v916
    %v1540 = vmul.f32 %v1498, %v916
    %v1541 = vmul.f32 %v1501, %v916
    %v1542 = vmul.f32 %v1504, %v916
    %v1543 = vmul.f32 %v1507, %v916
    %v1544 = vmul.f32 %v1510, %v916
    %v1545 = vmul.f32 %v1513, %v916
    %v1546 = vmul.f32 %v1516, %v916
    %v1547 = vmul.f32 %v1519, %v916
    %v1548 = vmul.f32 %v1522, %v916
    %v1549 = vmul.f32 %v1525, %v916
    %v1550 = vmul.f32 %v1528, %v916
    %v1551 = vmul.f32 %v1531, %v916
    %v1552 = vmul.f32 %v1534, %v916
    %v1553 = vmul.f32 %v1537, %v916
    %v1554 = vsub.f32 %v1474, %v1538
    %v1555 = vsub.f32 %v1475, %v1539
    %v1556 = vsub.f32 %v1476, %v1540
    %v1557 = vsub.f32 %v1477, %v1541
    %v1558 = vsub.f32 %v1478, %v1542
    %v1559 = vsub.f32 %v1479, %v1543
    %v1560 = vsub.f32 %v1480, %v1544
    %v1561 = vsub.f32 %v1481, %v1545
    %v1562 = vsub.f32 %v1482, %v1546
    %v1563 = vsub.f32 %v1483, %v1547
    %v1564 = vsub.f32 %v1484, %v1548
    %v1565 = vsub.f32 %v1485, %v1549
    %v1566 = vsub.f32 %v1486, %v1550
    %v1567 = vsub.f32 %v1487, %v1551
    %v1568 = vsub.f32 %v1488, %v1552
    %v1569 = vsub.f32 %v1489, %v1553
    %v1570 = vmul.f32 %v1554, %v1554
    %v1571 = vmul.f32 %v1555, %v1555
    %v1572 = vmul.f32 %v1556, %v1556
    %v1573 = vmul.f32 %v1557, %v1557
    %v1574 = vmul.f32 %v1558, %v1558
    %v1575 = vmul.f32 %v1559, %v1559
    %v1576 = vmul.f32 %v1560, %v1560
    %v1577 = vmul.f32 %v1561, %v1561
    %v1578 = vmul.f32 %v1562, %v1562
    %v1579 = vmul.f32 %v1563, %v1563
    %v1580 = vmul.f32 %v1564, %v1564
    %v1581 = vmul.f32 %v1565, %v1565
    %v1582 = vmul.f32 %v1566, %v1566
    %v1583 = vmul.f32 %v1567, %v1567
    %v1584 = vmul.f32 %v1568, %v1568
    %v1585 = vmul.f32 %v1569, %v1569
    %v1586 = vsel %vm74, %v1570, 0.0
    %1587 = vadd.xlane.f32.xlu0 %v1586
    %v1588 = vpop.xlane.xlu0 %1587
    %v1589 = vsel %vm74, %v1571, 0.0
    %1590 = vadd.xlane.f32.xlu0 %v1589
    %v1591 = vpop.xlane.xlu0 %1590
    %v1592 = vsel %vm74, %v1572, 0.0
    %1593 = vadd.xlane.f32.xlu0 %v1592
    %v1594 = vpop.xlane.xlu0 %1593
    %v1595 = vsel %vm74, %v1573, 0.0
    %1596 = vadd.xlane.f32.xlu0 %v1595
    %v1597 = vpop.xlane.xlu0 %1596
    %v1598 = vsel %vm74, %v1574, 0.0
    %1599 = vadd.xlane.f32.xlu0 %v1598
    %v1600 = vpop.xlane.xlu0 %1599
    %v1601 = vsel %vm74, %v1575, 0.0
    %1602 = vadd.xlane.f32.xlu0 %v1601
    %v1603 = vpop.xlane.xlu0 %1602
    %v1604 = vsel %vm74, %v1576, 0.0
    %1605 = vadd.xlane.f32.xlu0 %v1604
    %v1606 = vpop.xlane.xlu0 %1605
    %v1607 = vsel %vm74, %v1577, 0.0
    %1608 = vadd.xlane.f32.xlu0 %v1607
    %v1609 = vpop.xlane.xlu0 %1608
    %v1610 = vsel %vm74, %v1578, 0.0
    %1611 = vadd.xlane.f32.xlu0 %v1610
    %v1612 = vpop.xlane.xlu0 %1611
    %v1613 = vsel %vm74, %v1579, 0.0
    %1614 = vadd.xlane.f32.xlu0 %v1613
    %v1615 = vpop.xlane.xlu0 %1614
    %v1616 = vsel %vm74, %v1580, 0.0
    %1617 = vadd.xlane.f32.xlu0 %v1616
    %v1618 = vpop.xlane.xlu0 %1617
    %v1619 = vsel %vm74, %v1581, 0.0
    %1620 = vadd.xlane.f32.xlu0 %v1619
    %v1621 = vpop.xlane.xlu0 %1620
    %v1622 = vsel %vm74, %v1582, 0.0
    %1623 = vadd.xlane.f32.xlu0 %v1622
    %v1624 = vpop.xlane.xlu0 %1623
    %v1625 = vsel %vm74, %v1583, 0.0
    %1626 = vadd.xlane.f32.xlu0 %v1625
    %v1627 = vpop.xlane.xlu0 %1626
    %v1628 = vsel %vm74, %v1584, 0.0
    %1629 = vadd.xlane.f32.xlu0 %v1628
    %v1630 = vpop.xlane.xlu0 %1629
    %v1631 = vsel %vm74, %v1585, 0.0
    %1632 = vadd.xlane.f32.xlu0 %v1631
    %v1633 = vpop.xlane.xlu0 %1632
    %v1634 = vmul.f32 %v1588, %v916
    %v1635 = vmul.f32 %v1591, %v916
    %v1636 = vmul.f32 %v1594, %v916
    %v1637 = vmul.f32 %v1597, %v916
    %v1638 = vmul.f32 %v1600, %v916
    %v1639 = vmul.f32 %v1603, %v916
    %v1640 = vmul.f32 %v1606, %v916
    %v1641 = vmul.f32 %v1609, %v916
    %v1642 = vmul.f32 %v1612, %v916
    %v1643 = vmul.f32 %v1615, %v916
    %v1644 = vmul.f32 %v1618, %v916
    %v1645 = vmul.f32 %v1621, %v916
    %v1646 = vmul.f32 %v1624, %v916
    %v1647 = vmul.f32 %v1627, %v916
    %v1648 = vmul.f32 %v1630, %v916
    %v1649 = vmul.f32 %v1633, %v916
    %v1650 = vadd.f32 %v1634, 1e-05
    %v1651 = vadd.f32 %v1635, 1e-05
    %v1652 = vadd.f32 %v1636, 1e-05
    %v1653 = vadd.f32 %v1637, 1e-05
    %v1654 = vadd.f32 %v1638, 1e-05
    %v1655 = vadd.f32 %v1639, 1e-05
    %v1656 = vadd.f32 %v1640, 1e-05
    %v1657 = vadd.f32 %v1641, 1e-05
    %v1658 = vadd.f32 %v1642, 1e-05
    %v1659 = vadd.f32 %v1643, 1e-05
    %v1660 = vadd.f32 %v1644, 1e-05
    %v1661 = vadd.f32 %v1645, 1e-05
    %v1662 = vadd.f32 %v1646, 1e-05
    %v1663 = vadd.f32 %v1647, 1e-05
    %v1664 = vadd.f32 %v1648, 1e-05
    %v1665 = vadd.f32 %v1649, 1e-05
    %v1666 = vrsqrt.pop %v1650
    %v1667 = vmul.f32 %v1666, %v1650
    %v1668 = vmul.f32 %v1667, %v1666
    %v1669 = vmul.f32 0.5, %v1668
    %v1670 = vsub.f32 1.5, %v1669
    %v1671 = vmul.f32 %v1666, %v1670
    %vm1672 = vweird.f32 %v1650
    %vm1673 = vweird.f32 %v1666
    %vm1674 = vmor %vm1672, %vm1673
    %v1675 = vsel %vm1674, %v1666, %v1671
    %v1676 = vrsqrt.pop %v1651
    %v1677 = vmul.f32 %v1676, %v1651
    %v1678 = vmul.f32 %v1677, %v1676
    %v1679 = vmul.f32 0.5, %v1678
    %v1680 = vsub.f32 1.5, %v1679
    %v1681 = vmul.f32 %v1676, %v1680
    %vm1682 = vweird.f32 %v1651
    %vm1683 = vweird.f32 %v1676
    %vm1684 = vmor %vm1682, %vm1683
    %v1685 = vsel %vm1684, %v1676, %v1681
    %v1686 = vrsqrt.pop %v1652
    %v1687 = vmul.f32 %v1686, %v1652
    %v1688 = vmul.f32 %v1687, %v1686
    %v1689 = vmul.f32 0.5, %v1688
    %v1690 = vsub.f32 1.5, %v1689
    %v1691 = vmul.f32 %v1686, %v1690
    %vm1692 = vweird.f32 %v1652
    %vm1693 = vweird.f32 %v1686
    %vm1694 = vmor %vm1692, %vm1693
    %v1695 = vsel %vm1694, %v1686, %v1691
    %v1696 = vrsqrt.pop %v1653
    %v1697 = vmul.f32 %v1696, %v1653
    %v1698 = vmul.f32 %v1697, %v1696
    %v1699 = vmul.f32 0.5, %v1698
    %v1700 = vsub.f32 1.5, %v1699
    %v1701 = vmul.f32 %v1696, %v1700
    %vm1702 = vweird.f32 %v1653
    %vm1703 = vweird.f32 %v1696
    %vm1704 = vmor %vm1702, %vm1703
    %v1705 = vsel %vm1704, %v1696, %v1701
    %v1706 = vrsqrt.pop %v1654
    %v1707 = vmul.f32 %v1706, %v1654
    %v1708 = vmul.f32 %v1707, %v1706
    %v1709 = vmul.f32 0.5, %v1708
    %v1710 = vsub.f32 1.5, %v1709
    %v1711 = vmul.f32 %v1706, %v1710
    %vm1712 = vweird.f32 %v1654
    %vm1713 = vweird.f32 %v1706
    %vm1714 = vmor %vm1712, %vm1713
    %v1715 = vsel %vm1714, %v1706, %v1711
    %v1716 = vrsqrt.pop %v1655
    %v1717 = vmul.f32 %v1716, %v1655
    %v1718 = vmul.f32 %v1717, %v1716
    %v1719 = vmul.f32 0.5, %v1718
    %v1720 = vsub.f32 1.5, %v1719
    %v1721 = vmul.f32 %v1716, %v1720
    %vm1722 = vweird.f32 %v1655
    %vm1723 = vweird.f32 %v1716
    %vm1724 = vmor %vm1722, %vm1723
    %v1725 = vsel %vm1724, %v1716, %v1721
    %v1726 = vrsqrt.pop %v1656
    %v1727 = vmul.f32 %v1726, %v1656
    %v1728 = vmul.f32 %v1727, %v1726
    %v1729 = vmul.f32 0.5, %v1728
    %v1730 = vsub.f32 1.5, %v1729
    %v1731 = vmul.f32 %v1726, %v1730
    %vm1732 = vweird.f32 %v1656
    %vm1733 = vweird.f32 %v1726
    %vm1734 = vmor %vm1732, %vm1733
    %v1735 = vsel %vm1734, %v1726, %v1731
    %v1736 = vrsqrt.pop %v1657
    %v1737 = vmul.f32 %v1736, %v1657
    %v1738 = vmul.f32 %v1737, %v1736
    %v1739 = vmul.f32 0.5, %v1738
    %v1740 = vsub.f32 1.5, %v1739
    %v1741 = vmul.f32 %v1736, %v1740
    %vm1742 = vweird.f32 %v1657
    %vm1743 = vweird.f32 %v1736
    %vm1744 = vmor %vm1742, %vm1743
    %v1745 = vsel %vm1744, %v1736, %v1741
    %v1746 = vrsqrt.pop %v1658
    %v1747 = vmul.f32 %v1746, %v1658
    %v1748 = vmul.f32 %v1747, %v1746
    %v1749 = vmul.f32 0.5, %v1748
    %v1750 = vsub.f32 1.5, %v1749
    %v1751 = vmul.f32 %v1746, %v1750
    %vm1752 = vweird.f32 %v1658
    %vm1753 = vweird.f32 %v1746
    %vm1754 = vmor %vm1752, %vm1753
    %v1755 = vsel %vm1754, %v1746, %v1751
    %v1756 = vrsqrt.pop %v1659
    %v1757 = vmul.f32 %v1756, %v1659
    %v1758 = vmul.f32 %v1757, %v1756
    %v1759 = vmul.f32 0.5, %v1758
    %v1760 = vsub.f32 1.5, %v1759
    %v1761 = vmul.f32 %v1756, %v1760
    %vm1762 = vweird.f32 %v1659
    %vm1763 = vweird.f32 %v1756
    %vm1764 = vmor %vm1762, %vm1763
    %v1765 = vsel %vm1764, %v1756, %v1761
    %v1766 = vrsqrt.pop %v1660
    %v1767 = vmul.f32 %v1766, %v1660
    %v1768 = vmul.f32 %v1767, %v1766
    %v1769 = vmul.f32 0.5, %v1768
    %v1770 = vsub.f32 1.5, %v1769
    %v1771 = vmul.f32 %v1766, %v1770
    %vm1772 = vweird.f32 %v1660
    %vm1773 = vweird.f32 %v1766
    %vm1774 = vmor %vm1772, %vm1773
    %v1775 = vsel %vm1774, %v1766, %v1771
    %v1776 = vrsqrt.pop %v1661
    %v1777 = vmul.f32 %v1776, %v1661
    %v1778 = vmul.f32 %v1777, %v1776
    %v1779 = vmul.f32 0.5, %v1778
    %v1780 = vsub.f32 1.5, %v1779
    %v1781 = vmul.f32 %v1776, %v1780
    %vm1782 = vweird.f32 %v1661
    %vm1783 = vweird.f32 %v1776
    %vm1784 = vmor %vm1782, %vm1783
    %v1785 = vsel %vm1784, %v1776, %v1781
    %v1786 = vrsqrt.pop %v1662
    %v1787 = vmul.f32 %v1786, %v1662
    %v1788 = vmul.f32 %v1787, %v1786
    %v1789 = vmul.f32 0.5, %v1788
    %v1790 = vsub.f32 1.5, %v1789
    %v1791 = vmul.f32 %v1786, %v1790
    %vm1792 = vweird.f32 %v1662
    %vm1793 = vweird.f32 %v1786
    %vm1794 = vmor %vm1792, %vm1793
    %v1795 = vsel %vm1794, %v1786, %v1791
    %v1796 = vrsqrt.pop %v1663
    %v1797 = vmul.f32 %v1796, %v1663
    %v1798 = vmul.f32 %v1797, %v1796
    %v1799 = vmul.f32 0.5, %v1798
    %v1800 = vsub.f32 1.5, %v1799
    %v1801 = vmul.f32 %v1796, %v1800
    %vm1802 = vweird.f32 %v1663
    %vm1803 = vweird.f32 %v1796
    %vm1804 = vmor %vm1802, %vm1803
    %v1805 = vsel %vm1804, %v1796, %v1801
    %v1806 = vrsqrt.pop %v1664
    %v1807 = vmul.f32 %v1806, %v1664
    %v1808 = vmul.f32 %v1807, %v1806
    %v1809 = vmul.f32 0.5, %v1808
    %v1810 = vsub.f32 1.5, %v1809
    %v1811 = vmul.f32 %v1806, %v1810
    %vm1812 = vweird.f32 %v1664
    %vm1813 = vweird.f32 %v1806
    %vm1814 = vmor %vm1812, %vm1813
    %v1815 = vsel %vm1814, %v1806, %v1811
    %v1816 = vrsqrt.pop %v1665
    %v1817 = vmul.f32 %v1816, %v1665
    %v1818 = vmul.f32 %v1817, %v1816
    %v1819 = vmul.f32 0.5, %v1818
    %v1820 = vsub.f32 1.5, %v1819
    %v1821 = vmul.f32 %v1816, %v1820
    %vm1822 = vweird.f32 %v1665
    %vm1823 = vweird.f32 %v1816
    %vm1824 = vmor %vm1822, %vm1823
    %v1825 = vsel %vm1824, %v1816, %v1821
    %v1826 = vmul.f32 %v1554, %v1675
    %v1827 = vmul.f32 %v1555, %v1685
    %v1828 = vmul.f32 %v1556, %v1695
    %v1829 = vmul.f32 %v1557, %v1705
    %v1830 = vmul.f32 %v1558, %v1715
    %v1831 = vmul.f32 %v1559, %v1725
    %v1832 = vmul.f32 %v1560, %v1735
    %v1833 = vmul.f32 %v1561, %v1745
    %v1834 = vmul.f32 %v1562, %v1755
    %v1835 = vmul.f32 %v1563, %v1765
    %v1836 = vmul.f32 %v1564, %v1775
    %v1837 = vmul.f32 %v1565, %v1785
    %v1838 = vmul.f32 %v1566, %v1795
    %v1839 = vmul.f32 %v1567, %v1805
    %v1840 = vmul.f32 %v1568, %v1815
    %v1841 = vmul.f32 %v1569, %v1825
    %v1842 = vperm.slane %v845, 3
    %v1843 = vmul.f32 %v1826, %v1842
    %v1844 = vmul.f32 %v1827, %v1842
    %v1845 = vmul.f32 %v1828, %v1842
    %v1846 = vmul.f32 %v1829, %v1842
    %v1847 = vmul.f32 %v1830, %v1842
    %v1848 = vmul.f32 %v1831, %v1842
    %v1849 = vmul.f32 %v1832, %v1842
    %v1850 = vmul.f32 %v1833, %v1842
    %v1851 = vmul.f32 %v1834, %v1842
    %v1852 = vmul.f32 %v1835, %v1842
    %v1853 = vmul.f32 %v1836, %v1842
    %v1854 = vmul.f32 %v1837, %v1842
    %v1855 = vmul.f32 %v1838, %v1842
    %v1856 = vmul.f32 %v1839, %v1842
    %v1857 = vmul.f32 %v1840, %v1842
    %v1858 = vmul.f32 %v1841, %v1842
    %v1859 = vperm.slane %v845, 4
    %v1860 = vadd.f32 %v1843, %v1859
    %v1861 = vadd.f32 %v1844, %v1859
    %v1862 = vadd.f32 %v1845, %v1859
    %v1863 = vadd.f32 %v1846, %v1859
    %v1864 = vadd.f32 %v1847, %v1859
    %v1865 = vadd.f32 %v1848, %v1859
    %v1866 = vadd.f32 %v1849, %v1859
    %v1867 = vadd.f32 %v1850, %v1859
    %v1868 = vadd.f32 %v1851, %v1859
    %v1869 = vadd.f32 %v1852, %v1859
    %v1870 = vadd.f32 %v1853, %v1859
    %v1871 = vadd.f32 %v1854, %v1859
    %v1872 = vadd.f32 %v1855, %v1859
    %v1873 = vadd.f32 %v1856, %v1859
    %v1874 = vadd.f32 %v1857, %v1859
    %v1875 = vadd.f32 %v1858, %v1859
    %1876 = vst.msk [vmem:[#allocation7] sm:$0xff] %vm74, %v1860
    %1877 = vst.msk [vmem:[#allocation7 + $0x8] sm:$0xff] %vm74, %v1861
    %1878 = vst.msk [vmem:[#allocation7 + $0x10] sm:$0xff] %vm74, %v1862
    %1879 = vst.msk [vmem:[#allocation7 + $0x18] sm:$0xff] %vm74, %v1863
    %1880 = vst.msk [vmem:[#allocation7 + $0x20] sm:$0xff] %vm74, %v1864
    %1881 = vst.msk [vmem:[#allocation7 + $0x28] sm:$0xff] %vm74, %v1865
    %1882 = vst.msk [vmem:[#allocation7 + $0x30] sm:$0xff] %vm74, %v1866
    %1883 = vst.msk [vmem:[#allocation7 + $0x38] sm:$0xff] %vm74, %v1867
    %1884 = vst.msk [vmem:[#allocation7 + $0x40] sm:$0xff] %vm74, %v1868
    %1885 = vst.msk [vmem:[#allocation7 + $0x48] sm:$0xff] %vm74, %v1869
    %1886 = vst.msk [vmem:[#allocation7 + $0x50] sm:$0xff] %vm74, %v1870
    %1887 = vst.msk [vmem:[#allocation7 + $0x58] sm:$0xff] %vm74, %v1871
    %1888 = vst.msk [vmem:[#allocation7 + $0x60] sm:$0xff] %vm74, %v1872
    %1889 = vst.msk [vmem:[#allocation7 + $0x68] sm:$0xff] %vm74, %v1873
    %1890 = vst.msk [vmem:[#allocation7 + $0x70] sm:$0xff] %vm74, %v1874
    %1891 = vst.msk [vmem:[#allocation7 + $0x78] sm:$0xff] %vm74, %v1875
    // Predicated region
    $region34: #{tpu_custom_call.1} parent=1 // pred_check
      _
    $region35: #{tpu_custom_call.1} parent=1 // pred_check_branch
      %1893 = sbr.rel (0) target = $region37
    $region36: #{tpu_custom_call.1} parent=1 // pred_region
      %1895 = vsyncadd [#allocation4], 0
      %s1896 = sshll.u32 [#allocation7], 4
      %s1897 = int_to_ptr.vmem [resolvable:$true] %s1896
      %s1898 = sshll.u32 %s6, 4
      %s1899 = int_to_ptr.hbm [resolvable:$true] %s1898
      %1904 = dma.vmem_to_hbm [thread:$0]  %s1897, 2048, %s1899, [#allocation4], 128, 128, 8
    $region37: #{tpu_custom_call.1} parent=1 // pred_fallthru
      _
    // Predicated region
    $region38: #{tpu_custom_call.1} parent=1 // pred_check
      _
    $region39: #{tpu_custom_call.1} parent=1 // pred_check_branch
      %1906 = sbr.rel (0) target = $region41
    $region40: #{tpu_custom_call.1} parent=1 // pred_region
      %1908 = dma.done [#allocation4], 2048
    $region41: #{tpu_custom_call.1} parent=1 // pred_fallthru
      _
    %1909 = vsyncpa [#allocation3], 1
    %1910 = vsyncpa [#allocation6], 1
    %1911 = vsyncpa [#allocation4], 1

</llo_original>
